<compile_context>
chip_gen: v5e
topology: v5e:2x2
jax: 0.10.0
libtpu: 0.0.40
codegen_flags: <defaults>
</compile_context>

<pallas_src>
import functools

import jax
import jax.numpy as jnp
from jax.experimental import pallas as pl
from jax.experimental.pallas import tpu as pltpu


def _round_up(x, m):
    return ((x + m - 1) // m) * m


def _weight_linear_kernel(w_ref, xc_ref, part_ref, *, tile_n, n_rows, inv_n,
                          precision, w_sliced):
    t = pl.program_id(0)
    row0 = t * tile_n

    # Per-tile importance weights, lane-dense (1, tile_n).  When w is resident
    # (one DMA for the whole call) we slice it here; otherwise the BlockSpec
    # already delivered exactly this tile's weights.
    if w_sliced:
        start = pl.multiple_of(row0, 128)          # tile_n is a multiple of 128
        wv = w_ref[:, pl.ds(start, tile_n)]
    else:
        wv = w_ref[...]
    # exp() goes to the EUP slot; 1/N folded as a reciprocal multiply.  The
    # padded w lanes are zeros (exp(0)=1, finite) and only ever multiply rows
    # of XC that are explicitly zeroed below.
    ew = jnp.exp(wv.astype(jnp.float32)) * jnp.float32(inv_n)

    # Ragged tail handled in-kernel (no host-side pad of XC): rows past N are
    # zeroed so undefined (possibly non-finite) DMA pad data never reaches the
    # reduction.  One cheap VPU select per vreg, hidden under the tile DMA.
    rows = row0 + jax.lax.broadcasted_iota(jnp.int32, (tile_n, 1), 0)
    xc = jnp.where(rows < n_rows, xc_ref[...].astype(jnp.float32), 0.0)

    # (1, tile_n) @ (tile_n, D) partial xc_avg for this tile, f32 accumulation.
    part_ref[...] = jnp.dot(ew, xc, preferred_element_type=jnp.float32,
                            precision=precision)


def weight_linear_forward(w, XC, xt_avg, *, tile_n=None, precision=None,
                          xc_tile_bytes=8 << 20):
    """w: (N,), XC: (N, D), xt_avg: (D,)  ->  scalar f32 loss."""
    N, D = XC.shape
    assert w.shape == (N,)
    assert xt_avg.shape == (D,)
    inv_n = 1.0 / N  # module: exp(w) / gender0_num, and w has gender0_num rows

    itemsize = jnp.dtype(XC.dtype).itemsize
    row_bytes = max(D * itemsize, 1)

    if tile_n is None:
        # ~8 MiB XC tiles: large enough to sit near the HBM roofline on all
        # three generations, small enough that 2x double-buffered tiles +
        # residents stay comfortably inside v7x's scoped VMEM.
        tile_n = max(xc_tile_bytes // row_bytes, 1)
    if tile_n >= N:
        tile_n = N                                  # one tile covers everything
    else:
        # Multiple of 128 keeps the XC block and the in-kernel w lane-slice
        # aligned.  (For enormous D the 128-row floor can exceed the byte
        # budget; acceptable corner case.)
        tile_n = max((tile_n // 128) * 128, 128)

    n_tiles = pl.cdiv(N, tile_n)

    # w is tiny: pad *it* (not XC) to the tiled extent so every in-bounds w
    # lane is finite; reshape lane-dense.
    w_pad_len = n_tiles * tile_n
    w2 = jnp.pad(w, (0, w_pad_len - N)).reshape(1, w_pad_len)

    # Resident w (single constant-index block, sliced per tile with pl.ds) for
    # moderate N; per-tile (1, tile_n) blocks for very large N.
    w_resident = w_pad_len <= 128 * 1024
    w_sliced = w_resident and n_tiles > 1
    if w_resident:
        w_spec = pl.BlockSpec((1, w_pad_len), lambda t: (0, 0))
        w_buf_bytes = 2 * _round_up(w_pad_len, 128) * 32   # (8,128)-tile padded
    else:
        w_spec = pl.BlockSpec((1, tile_n), lambda t: (0, t))
        w_buf_bytes = 2 * _round_up(tile_n, 128) * 32

    # VMEM budget: double-buffered XC tiles + w buffers + (1, D) output blocks
    # + slack.  Never below the platform default scoped limit; capped well
    # under v7x's 64 MiB physical VMEM.
    need = (2 * tile_n * D * itemsize
            + w_buf_bytes
            + 2 * _round_up(D, 128) * 32
            + (2 << 20))
    vmem_limit = int(min(max(need, 32 << 20), 44 << 20))

    kernel = functools.partial(
        _weight_linear_kernel,
        tile_n=tile_n, n_rows=N, inv_n=inv_n,
        precision=precision, w_sliced=w_sliced)

    partials = pl.pallas_call(
        kernel,
        grid=(n_tiles,),
        in_specs=[
            w_spec,                                           # weights
            pl.BlockSpec((tile_n, D), lambda t: (t, 0)),      # XC tile (streamed)
        ],
        out_specs=pl.BlockSpec((1, D), lambda t: (t, 0)),     # per-tile partial
        out_shape=jax.ShapeDtypeStruct((n_tiles, D), jnp.float32),
        compiler_params=pltpu.CompilerParams(
            # "parallel": each step owns its output block, so v7x's two
            # TensorCores can split the tile range; no-op on v5e/v6e.
            dimension_semantics=("parallel",),
            vmem_limit_bytes=vmem_limit,
        ),
    )(w2, XC)

    # Tiny final combine in plain JAX: sum the per-tile partials and take the
    # sum-of-squares against the target average.
    xc_avg = jnp.sum(partials, axis=0)
    diff = xc_avg - xt_avg.astype(jnp.float32)
    return jnp.sum(diff * diff)


if __name__ == "__main__":
    # Shapes consistent with the module: gender0_num (N) = 2777 (the default),
    # feature dim D = 128.  Exercises the ragged-N in-kernel masking path.
    N, D = 2777, 128
    key = jax.random.PRNGKey(0)
    kw, k_xc, k_xt = jax.random.split(key, 3)

    # w is the module's trainable parameter (init is zeros); use small random
    # values so exp() is actually exercised.
    w = 0.05 * jax.random.normal(kw, (N,), dtype=jnp.float32)
    XC = jax.random.normal(k_xc, (N, D), dtype=jnp.float32)
    xt_avg = jax.random.normal(k_xt, (D,), dtype=jnp.float32)

    fwd = jax.jit(weight_linear_forward)
    loss = jax.block_until_ready(fwd(w, XC, xt_avg))

    # Pure-JAX reference with f32 matmul precision; the kernel's default MXU
    # pass is bf16, so compare with a tolerance that covers that.
    xc_avg_ref = jnp.einsum("nd,n->d", XC, jnp.exp(w) / N,
                            precision=jax.lax.Precision.HIGHEST)
    ref = jnp.sum((xc_avg_ref - xt_avg) ** 2)
    assert jnp.allclose(loss, ref, rtol=5e-3, atol=5e-3), (loss, ref)

    print("KERNEL_OK")
</pallas_src>

<mosaic_0001>
module attributes {stable_mosaic.version = 11 : i64} {
  func.func @_weight_linear_kernel(%arg0: i32, %arg1: memref<1x2777xf32, #tpu.memory_space<vmem>>, %arg2: memref<2777x128xf32, #tpu.memory_space<vmem>>, %arg3: memref<1x128xf32, #tpu.memory_space<vmem>>) attributes {dimension_semantics = [#tpu.dimension_semantics<parallel>], iteration_bounds = array<i64: 1>, scalar_prefetch = 0 : i64, scratch_operands = 0 : i64, tpu.core_type = #tpu.core_type<tc>, window_params = [{pipeline_mode = #tpu.pipeline_mode<synchronous>, transform_indices = @transform_0, window_bounds = array<i64: 1, 2777>}, {transform_indices = @transform_1, window_bounds = array<i64: 2777, 128>}, {transform_indices = @transform_2, window_bounds = array<i64: 1, 128>}]} {
    %c2777_i32 = arith.constant 2777 : i32
    %0 = arith.muli %arg0, %c2777_i32 : i32
    %c0 = arith.constant 0 : index
    %c0_0 = arith.constant 0 : index
    %1 = vector.load %arg1[%c0, %c0_0] : memref<1x2777xf32, #tpu.memory_space<vmem>>, vector<1x2777xf32>
    %2 = math.exp %1 : vector<1x2777xf32>
    %cst = arith.constant 3.60100821E-4 : f32
    %3 = vector.broadcast %cst : f32 to vector<1x2777xf32>
    %4 = arith.mulf %2, %3 : vector<1x2777xf32>
    %5 = tpu.iota {dimensions = array<i32: 0>} : vector<2777x1xi32>
    %6 = vector.broadcast %0 : i32 to vector<2777x1xi32>
    %7 = arith.addi %6, %5 : vector<2777x1xi32>
    %c2777_i32_1 = arith.constant 2777 : i32
    %8 = vector.broadcast %c2777_i32_1 : i32 to vector<2777x1xi32>
    %9 = arith.cmpi slt, %7, %8 : vector<2777x1xi32>
    %c0_2 = arith.constant 0 : index
    %c0_3 = arith.constant 0 : index
    %10 = vector.load %arg2[%c0_2, %c0_3] : memref<2777x128xf32, #tpu.memory_space<vmem>>, vector<2777x128xf32>
    %cst_4 = arith.constant 0.000000e+00 : f32
    %11 = vector.shape_cast %9 : vector<2777x1xi1> to vector<2777x1xi1>
    %12 = vector.broadcast %11 : vector<2777x1xi1> to vector<2777x128xi1>
    %13 = vector.broadcast %cst_4 : f32 to vector<2777x128xf32>
    %14 = arith.select %12, %10, %13 : vector<2777x128xi1>, vector<2777x128xf32>
    %cst_5 = arith.constant dense<0.000000e+00> : vector<1x128xf32>
    %15 = tpu.matmul %4, %14, %cst_5 {dimension_numbers = #tpu.dot_dimension_numbers<[1], [0], [0], [1], [0, 0, 1, 1], [], []>} : vector<1x2777xf32>, vector<2777x128xf32>, vector<1x128xf32> -> vector<1x128xf32>
    %c0_6 = arith.constant 0 : index
    %c0_7 = arith.constant 0 : index
    %16 = vector.load %arg3[%c0_6, %c0_7] : memref<1x128xf32, #tpu.memory_space<vmem>>, vector<1x128xf32>
    tpu.vector_store %arg3[%c0_6, %c0_7], %15 {strides = array<i32>} : memref<1x128xf32, #tpu.memory_space<vmem>>, vector<1x128xf32>,
    return
  }
  func.func @transform_0(%arg0: i32) -> (i32, i32) {
    %c0_i32 = arith.constant 0 : i32
    %c0_i32_0 = arith.constant 0 : i32
    %c0_i32_1 = arith.constant 0 : i32
    return %c0_i32, %c0_i32_0 : i32, i32
  }
  func.func @transform_1(%arg0: i32) -> (i32, i32) {
    %c0_i32 = arith.constant 0 : i32
    %c0_i32_0 = arith.constant 0 : i32
    return %arg0, %c0_i32 : i32, i32
  }
  func.func @transform_2(%arg0: i32) -> (i32, i32) {
    %c0_i32 = arith.constant 0 : i32
    %c0_i32_0 = arith.constant 0 : i32
    return %arg0, %c0_i32 : i32, i32
  }
}

</mosaic_0001>

<llo_original>
// kernel: weight_linear_forward.1
$region0: #{weight_linear_forward.1}
  #allocation0 [shape = 'u32[]', space=smem, size = 0x4, offset = 0x4, fixed_abs, tag = 'smem constant byte address 0x4 - core index']
  #allocation1 [shape = 'u32[72,128]{1,0:T(1,128)}', space=vmem, size = 0x9000, scoped, tag = 'internal scratch']
  %s0 = inlined_call_operand.vmem [shape: f32[1,2777], index: 0, kind: input, shape index: {}]
  %s1 = inlined_call_operand.hbm [shape: f32[2777,128], index: 1, kind: input, shape index: {}]
  %s2 = inlined_call_operand.vmem [shape: f32[1,128], index: 2, kind: output, shape index: {}]
  %s3 = sld [smem:[#allocation0]]
  $region22: #{weight_linear_forward.1} parent=0
    _
  %s5 = ssub.s32 1, %s3
  %s6 = scalar_select 0, %s5, %s3
  $region1: #{weight_linear_forward.1} parent=0
    #allocation2 [shape = 'u8[1425408]{0}', space=vmem, size = 0x15c000, scoped, tag = 'input window, operand 1, single buffered']
    #allocation3 [shape = 's32[1]{0}', space=sflag, size = 0x4, scoped, tag = 'scoped memory for weight_linear_forward.1']
    %7 = vsyncpa [#allocation3], 0
    // Predicated region
    $region2: #{weight_linear_forward.1} parent=1 // pred_check
      _
    $region3: #{weight_linear_forward.1} parent=1 // pred_check_branch
      %9 = sbr.rel (0) target = $region5
    $region4: #{weight_linear_forward.1} parent=1 // pred_region
      _
    $region5: #{weight_linear_forward.1} parent=1 // pred_fallthru
      _
    // Predicated region
    $region6: #{weight_linear_forward.1} parent=1 // pred_check
      _
    $region7: #{weight_linear_forward.1} parent=1 // pred_check_branch
      %11 = sbr.rel (0) target = $region9
    $region8: #{weight_linear_forward.1} parent=1 // pred_region
      %13 = vsyncadd [#allocation3], 0
      %s14 = sshll.u32 %s1, 4
      %s15 = int_to_ptr.hbm [resolvable:$true] %s14
      %s16 = sshll.u32 [#allocation2], 4
      %s17 = int_to_ptr.vmem [resolvable:$true] %s16
      %22 = dma.hbm_to_vmem [thread:$0]  %s15, 44544, %s17, [#allocation3], 128, 128, 8
    $region9: #{weight_linear_forward.1} parent=1 // pred_fallthru
      _
    // Predicated region
    $region10: #{weight_linear_forward.1} parent=1 // pred_check
      _
    $region11: #{weight_linear_forward.1} parent=1 // pred_check_branch
      %24 = sbr.rel (0) target = $region13
    $region12: #{weight_linear_forward.1} parent=1 // pred_region
      %26 = dma.done [#allocation3], 44544
    $region13: #{weight_linear_forward.1} parent=1 // pred_fallthru
      _
    %s27 = smul.u32 0, 2777
    %v28 = vld [vmem:[%s0] sm:$0xff]
    %v29 = vld [vmem:[%s0 + $0x8] sm:$0xff]
    %v30 = vld [vmem:[%s0 + $0x10] sm:$0x3f]
    %v31 = vmul.f32 %v28, 1.442695
    %v32 = vpow.pop %v31
    %v33 = vmul.f32 %v29, 1.442695
    %v34 = vpow.pop %v33
    %v35 = vmul.f32 %v30, 1.442695
    %v36 = vpow.pop %v35
    %v37 = vmul.f32 %v32, 0.00036010082
    %v38 = vmul.f32 %v34, 0.00036010082
    %v39 = vmul.f32 %v36, 0.00036010082
    %v40 = vlaneseq
    %v41 = vshrl.u32 %v40, 7
    %v42 = vadd.s32 %v41, 8
    %v43 = vadd.s32 %v41, 16
    %v44 = vadd.s32 %v41, 24
    %v45 = vadd.s32 %v41, 32
    %v46 = vadd.s32 %v41, 40
    %v47 = vadd.s32 %v41, 48
    %v48 = vadd.s32 %v41, 56
    %v49 = vadd.s32 %v41, 64
    %v50 = vadd.s32 %v41, 72
    %v51 = vadd.s32 %v41, 80
    %v52 = vadd.s32 %v41, 88
    %v53 = vadd.s32 %v41, 96
    %v54 = vadd.s32 %v41, 104
    %v55 = vadd.s32 %v41, 112
    %v56 = vadd.s32 %v41, 120
    %v57 = vadd.s32 %v41, 128
    %v58 = vadd.s32 %v41, 136
    %v59 = vadd.s32 %v41, 144
    %v60 = vadd.s32 %v41, 152
    %v61 = vadd.s32 %v41, 160
    %v62 = vadd.s32 %v41, 168
    %v63 = vadd.s32 %v41, 176
    %v64 = vadd.s32 %v41, 184
    %v65 = vadd.s32 %v41, 192
    %v66 = vadd.s32 %v41, 200
    %v67 = vadd.s32 %v41, 208
    %v68 = vadd.s32 %v41, 216
    %v69 = vadd.s32 %v41, 224
    %v70 = vadd.s32 %v41, 232
    %v71 = vadd.s32 %v41, 240
    %v72 = vadd.s32 %v41, 248
    %v73 = vadd.s32 %v41, 256
    %v74 = vadd.s32 %v41, 264
    %v75 = vadd.s32 %v41, 272
    %v76 = vadd.s32 %v41, 280
    %v77 = vadd.s32 %v41, 288
    %v78 = vadd.s32 %v41, 296
    %v79 = vadd.s32 %v41, 304
    %v80 = vadd.s32 %v41, 312
    %v81 = vadd.s32 %v41, 320
    %v82 = vadd.s32 %v41, 328
    %v83 = vadd.s32 %v41, 336
    %v84 = vadd.s32 %v41, 344
    %v85 = vadd.s32 %v41, 352
    %v86 = vadd.s32 %v41, 360
    %v87 = vadd.s32 %v41, 368
    %v88 = vadd.s32 %v41, 376
    %v89 = vadd.s32 %v41, 384
    %v90 = vadd.s32 %v41, 392
    %v91 = vadd.s32 %v41, 400
    %v92 = vadd.s32 %v41, 408
    %v93 = vadd.s32 %v41, 416
    %v94 = vadd.s32 %v41, 424
    %v95 = vadd.s32 %v41, 432
    %v96 = vadd.s32 %v41, 440
    %v97 = vadd.s32 %v41, 448
    %v98 = vadd.s32 %v41, 456
    %v99 = vadd.s32 %v41, 464
    %v100 = vadd.s32 %v41, 472
    %v101 = vadd.s32 %v41, 480
    %v102 = vadd.s32 %v41, 488
    %v103 = vadd.s32 %v41, 496
    %v104 = vadd.s32 %v41, 504
    %v105 = vadd.s32 %v41, 512
    %v106 = vadd.s32 %v41, 520
    %v107 = vadd.s32 %v41, 528
    %v108 = vadd.s32 %v41, 536
    %v109 = vadd.s32 %v41, 544
    %v110 = vadd.s32 %v41, 552
    %v111 = vadd.s32 %v41, 560
    %v112 = vadd.s32 %v41, 568
    %v113 = vadd.s32 %v41, 576
    %v114 = vadd.s32 %v41, 584
    %v115 = vadd.s32 %v41, 592
    %v116 = vadd.s32 %v41, 600
    %v117 = vadd.s32 %v41, 608
    %v118 = vadd.s32 %v41, 616
    %v119 = vadd.s32 %v41, 624
    %v120 = vadd.s32 %v41, 632
    %v121 = vadd.s32 %v41, 640
    %v122 = vadd.s32 %v41, 648
    %v123 = vadd.s32 %v41, 656
    %v124 = vadd.s32 %v41, 664
    %v125 = vadd.s32 %v41, 672
    %v126 = vadd.s32 %v41, 680
    %v127 = vadd.s32 %v41, 688
    %v128 = vadd.s32 %v41, 696
    %v129 = vadd.s32 %v41, 704
    %v130 = vadd.s32 %v41, 712
    %v131 = vadd.s32 %v41, 720
    %v132 = vadd.s32 %v41, 728
    %v133 = vadd.s32 %v41, 736
    %v134 = vadd.s32 %v41, 744
    %v135 = vadd.s32 %v41, 752
    %v136 = vadd.s32 %v41, 760
    %v137 = vadd.s32 %v41, 768
    %v138 = vadd.s32 %v41, 776
    %v139 = vadd.s32 %v41, 784
    %v140 = vadd.s32 %v41, 792
    %v141 = vadd.s32 %v41, 800
    %v142 = vadd.s32 %v41, 808
    %v143 = vadd.s32 %v41, 816
    %v144 = vadd.s32 %v41, 824
    %v145 = vadd.s32 %v41, 832
    %v146 = vadd.s32 %v41, 840
    %v147 = vadd.s32 %v41, 848
    %v148 = vadd.s32 %v41, 856
    %v149 = vadd.s32 %v41, 864
    %v150 = vadd.s32 %v41, 872
    %v151 = vadd.s32 %v41, 880
    %v152 = vadd.s32 %v41, 888
    %v153 = vadd.s32 %v41, 896
    %v154 = vadd.s32 %v41, 904
    %v155 = vadd.s32 %v41, 912
    %v156 = vadd.s32 %v41, 920
    %v157 = vadd.s32 %v41, 928
    %v158 = vadd.s32 %v41, 936
    %v159 = vadd.s32 %v41, 944
    %v160 = vadd.s32 %v41, 952
    %v161 = vadd.s32 %v41, 960
    %v162 = vadd.s32 %v41, 968
    %v163 = vadd.s32 %v41, 976
    %v164 = vadd.s32 %v41, 984
    %v165 = vadd.s32 %v41, 992
    %v166 = vadd.s32 %v41, 1000
    %v167 = vadd.s32 %v41, 1008
    %v168 = vadd.s32 %v41, 1016
    %v169 = vadd.s32 %v41, 1024
    %v170 = vadd.s32 %v41, 1032
    %v171 = vadd.s32 %v41, 1040
    %v172 = vadd.s32 %v41, 1048
    %v173 = vadd.s32 %v41, 1056
    %v174 = vadd.s32 %v41, 1064
    %v175 = vadd.s32 %v41, 1072
    %v176 = vadd.s32 %v41, 1080
    %v177 = vadd.s32 %v41, 1088
    %v178 = vadd.s32 %v41, 1096
    %v179 = vadd.s32 %v41, 1104
    %v180 = vadd.s32 %v41, 1112
    %v181 = vadd.s32 %v41, 1120
    %v182 = vadd.s32 %v41, 1128
    %v183 = vadd.s32 %v41, 1136
    %v184 = vadd.s32 %v41, 1144
    %v185 = vadd.s32 %v41, 1152
    %v186 = vadd.s32 %v41, 1160
    %v187 = vadd.s32 %v41, 1168
    %v188 = vadd.s32 %v41, 1176
    %v189 = vadd.s32 %v41, 1184
    %v190 = vadd.s32 %v41, 1192
    %v191 = vadd.s32 %v41, 1200
    %v192 = vadd.s32 %v41, 1208
    %v193 = vadd.s32 %v41, 1216
    %v194 = vadd.s32 %v41, 1224
    %v195 = vadd.s32 %v41, 1232
    %v196 = vadd.s32 %v41, 1240
    %v197 = vadd.s32 %v41, 1248
    %v198 = vadd.s32 %v41, 1256
    %v199 = vadd.s32 %v41, 1264
    %v200 = vadd.s32 %v41, 1272
    %v201 = vadd.s32 %v41, 1280
    %v202 = vadd.s32 %v41, 1288
    %v203 = vadd.s32 %v41, 1296
    %v204 = vadd.s32 %v41, 1304
    %v205 = vadd.s32 %v41, 1312
    %v206 = vadd.s32 %v41, 1320
    %v207 = vadd.s32 %v41, 1328
    %v208 = vadd.s32 %v41, 1336
    %v209 = vadd.s32 %v41, 1344
    %v210 = vadd.s32 %v41, 1352
    %v211 = vadd.s32 %v41, 1360
    %v212 = vadd.s32 %v41, 1368
    %v213 = vadd.s32 %v41, 1376
    %v214 = vadd.s32 %v41, 1384
    %v215 = vadd.s32 %v41, 1392
    %v216 = vadd.s32 %v41, 1400
    %v217 = vadd.s32 %v41, 1408
    %v218 = vadd.s32 %v41, 1416
    %v219 = vadd.s32 %v41, 1424
    %v220 = vadd.s32 %v41, 1432
    %v221 = vadd.s32 %v41, 1440
    %v222 = vadd.s32 %v41, 1448
    %v223 = vadd.s32 %v41, 1456
    %v224 = vadd.s32 %v41, 1464
    %v225 = vadd.s32 %v41, 1472
    %v226 = vadd.s32 %v41, 1480
    %v227 = vadd.s32 %v41, 1488
    %v228 = vadd.s32 %v41, 1496
    %v229 = vadd.s32 %v41, 1504
    %v230 = vadd.s32 %v41, 1512
    %v231 = vadd.s32 %v41, 1520
    %v232 = vadd.s32 %v41, 1528
    %v233 = vadd.s32 %v41, 1536
    %v234 = vadd.s32 %v41, 1544
    %v235 = vadd.s32 %v41, 1552
    %v236 = vadd.s32 %v41, 1560
    %v237 = vadd.s32 %v41, 1568
    %v238 = vadd.s32 %v41, 1576
    %v239 = vadd.s32 %v41, 1584
    %v240 = vadd.s32 %v41, 1592
    %v241 = vadd.s32 %v41, 1600
    %v242 = vadd.s32 %v41, 1608
    %v243 = vadd.s32 %v41, 1616
    %v244 = vadd.s32 %v41, 1624
    %v245 = vadd.s32 %v41, 1632
    %v246 = vadd.s32 %v41, 1640
    %v247 = vadd.s32 %v41, 1648
    %v248 = vadd.s32 %v41, 1656
    %v249 = vadd.s32 %v41, 1664
    %v250 = vadd.s32 %v41, 1672
    %v251 = vadd.s32 %v41, 1680
    %v252 = vadd.s32 %v41, 1688
    %v253 = vadd.s32 %v41, 1696
    %v254 = vadd.s32 %v41, 1704
    %v255 = vadd.s32 %v41, 1712
    %v256 = vadd.s32 %v41, 1720
    %v257 = vadd.s32 %v41, 1728
    %v258 = vadd.s32 %v41, 1736
    %v259 = vadd.s32 %v41, 1744
    %v260 = vadd.s32 %v41, 1752
    %v261 = vadd.s32 %v41, 1760
    %v262 = vadd.s32 %v41, 1768
    %v263 = vadd.s32 %v41, 1776
    %v264 = vadd.s32 %v41, 1784
    %v265 = vadd.s32 %v41, 1792
    %v266 = vadd.s32 %v41, 1800
    %v267 = vadd.s32 %v41, 1808
    %v268 = vadd.s32 %v41, 1816
    %v269 = vadd.s32 %v41, 1824
    %v270 = vadd.s32 %v41, 1832
    %v271 = vadd.s32 %v41, 1840
    %v272 = vadd.s32 %v41, 1848
    %v273 = vadd.s32 %v41, 1856
    %v274 = vadd.s32 %v41, 1864
    %v275 = vadd.s32 %v41, 1872
    %v276 = vadd.s32 %v41, 1880
    %v277 = vadd.s32 %v41, 1888
    %v278 = vadd.s32 %v41, 1896
    %v279 = vadd.s32 %v41, 1904
    %v280 = vadd.s32 %v41, 1912
    %v281 = vadd.s32 %v41, 1920
    %v282 = vadd.s32 %v41, 1928
    %v283 = vadd.s32 %v41, 1936
    %v284 = vadd.s32 %v41, 1944
    %v285 = vadd.s32 %v41, 1952
    %v286 = vadd.s32 %v41, 1960
    %v287 = vadd.s32 %v41, 1968
    %v288 = vadd.s32 %v41, 1976
    %v289 = vadd.s32 %v41, 1984
    %v290 = vadd.s32 %v41, 1992
    %v291 = vadd.s32 %v41, 2000
    %v292 = vadd.s32 %v41, 2008
    %v293 = vadd.s32 %v41, 2016
    %v294 = vadd.s32 %v41, 2024
    %v295 = vadd.s32 %v41, 2032
    %v296 = vadd.s32 %v41, 2040
    %v297 = vadd.s32 %v41, 2048
    %v298 = vadd.s32 %v41, 2056
    %v299 = vadd.s32 %v41, 2064
    %v300 = vadd.s32 %v41, 2072
    %v301 = vadd.s32 %v41, 2080
    %v302 = vadd.s32 %v41, 2088
    %v303 = vadd.s32 %v41, 2096
    %v304 = vadd.s32 %v41, 2104
    %v305 = vadd.s32 %v41, 2112
    %v306 = vadd.s32 %v41, 2120
    %v307 = vadd.s32 %v41, 2128
    %v308 = vadd.s32 %v41, 2136
    %v309 = vadd.s32 %v41, 2144
    %v310 = vadd.s32 %v41, 2152
    %v311 = vadd.s32 %v41, 2160
    %v312 = vadd.s32 %v41, 2168
    %v313 = vadd.s32 %v41, 2176
    %v314 = vadd.s32 %v41, 2184
    %v315 = vadd.s32 %v41, 2192
    %v316 = vadd.s32 %v41, 2200
    %v317 = vadd.s32 %v41, 2208
    %v318 = vadd.s32 %v41, 2216
    %v319 = vadd.s32 %v41, 2224
    %v320 = vadd.s32 %v41, 2232
    %v321 = vadd.s32 %v41, 2240
    %v322 = vadd.s32 %v41, 2248
    %v323 = vadd.s32 %v41, 2256
    %v324 = vadd.s32 %v41, 2264
    %v325 = vadd.s32 %v41, 2272
    %v326 = vadd.s32 %v41, 2280
    %v327 = vadd.s32 %v41, 2288
    %v328 = vadd.s32 %v41, 2296
    %v329 = vadd.s32 %v41, 2304
    %v330 = vadd.s32 %v41, 2312
    %v331 = vadd.s32 %v41, 2320
    %v332 = vadd.s32 %v41, 2328
    %v333 = vadd.s32 %v41, 2336
    %v334 = vadd.s32 %v41, 2344
    %v335 = vadd.s32 %v41, 2352
    %v336 = vadd.s32 %v41, 2360
    %v337 = vadd.s32 %v41, 2368
    %v338 = vadd.s32 %v41, 2376
    %v339 = vadd.s32 %v41, 2384
    %v340 = vadd.s32 %v41, 2392
    %v341 = vadd.s32 %v41, 2400
    %v342 = vadd.s32 %v41, 2408
    %v343 = vadd.s32 %v41, 2416
    %v344 = vadd.s32 %v41, 2424
    %v345 = vadd.s32 %v41, 2432
    %v346 = vadd.s32 %v41, 2440
    %v347 = vadd.s32 %v41, 2448
    %v348 = vadd.s32 %v41, 2456
    %v349 = vadd.s32 %v41, 2464
    %v350 = vadd.s32 %v41, 2472
    %v351 = vadd.s32 %v41, 2480
    %v352 = vadd.s32 %v41, 2488
    %v353 = vadd.s32 %v41, 2496
    %v354 = vadd.s32 %v41, 2504
    %v355 = vadd.s32 %v41, 2512
    %v356 = vadd.s32 %v41, 2520
    %v357 = vadd.s32 %v41, 2528
    %v358 = vadd.s32 %v41, 2536
    %v359 = vadd.s32 %v41, 2544
    %v360 = vadd.s32 %v41, 2552
    %v361 = vadd.s32 %v41, 2560
    %v362 = vadd.s32 %v41, 2568
    %v363 = vadd.s32 %v41, 2576
    %v364 = vadd.s32 %v41, 2584
    %v365 = vadd.s32 %v41, 2592
    %v366 = vadd.s32 %v41, 2600
    %v367 = vadd.s32 %v41, 2608
    %v368 = vadd.s32 %v41, 2616
    %v369 = vadd.s32 %v41, 2624
    %v370 = vadd.s32 %v41, 2632
    %v371 = vadd.s32 %v41, 2640
    %v372 = vadd.s32 %v41, 2648
    %v373 = vadd.s32 %v41, 2656
    %v374 = vadd.s32 %v41, 2664
    %v375 = vadd.s32 %v41, 2672
    %v376 = vadd.s32 %v41, 2680
    %v377 = vadd.s32 %v41, 2688
    %v378 = vadd.s32 %v41, 2696
    %v379 = vadd.s32 %v41, 2704
    %v380 = vadd.s32 %v41, 2712
    %v381 = vadd.s32 %v41, 2720
    %v382 = vadd.s32 %v41, 2728
    %v383 = vadd.s32 %v41, 2736
    %v384 = vadd.s32 %v41, 2744
    %v385 = vadd.s32 %v41, 2752
    %v386 = vadd.s32 %v41, 2760
    %v387 = vadd.s32 %v41, 2768
    %v388 = vadd.s32 %v41, 2776
    %v389 = vstv %s27
    %v390 = vadd.s32 %v389, %v41
    %v391 = vadd.s32 %v389, %v42
    %v392 = vadd.s32 %v389, %v43
    %v393 = vadd.s32 %v389, %v44
    %v394 = vadd.s32 %v389, %v45
    %v395 = vadd.s32 %v389, %v46
    %v396 = vadd.s32 %v389, %v47
    %v397 = vadd.s32 %v389, %v48
    %v398 = vadd.s32 %v389, %v49
    %v399 = vadd.s32 %v389, %v50
    %v400 = vadd.s32 %v389, %v51
    %v401 = vadd.s32 %v389, %v52
    %v402 = vadd.s32 %v389, %v53
    %v403 = vadd.s32 %v389, %v54
    %v404 = vadd.s32 %v389, %v55
    %v405 = vadd.s32 %v389, %v56
    %v406 = vadd.s32 %v389, %v57
    %v407 = vadd.s32 %v389, %v58
    %v408 = vadd.s32 %v389, %v59
    %v409 = vadd.s32 %v389, %v60
    %v410 = vadd.s32 %v389, %v61
    %v411 = vadd.s32 %v389, %v62
    %v412 = vadd.s32 %v389, %v63
    %v413 = vadd.s32 %v389, %v64
    %v414 = vadd.s32 %v389, %v65
    %v415 = vadd.s32 %v389, %v66
    %v416 = vadd.s32 %v389, %v67
    %v417 = vadd.s32 %v389, %v68
    %v418 = vadd.s32 %v389, %v69
    %v419 = vadd.s32 %v389, %v70
    %v420 = vadd.s32 %v389, %v71
    %v421 = vadd.s32 %v389, %v72
    %v422 = vadd.s32 %v389, %v73
    %v423 = vadd.s32 %v389, %v74
    %v424 = vadd.s32 %v389, %v75
    %v425 = vadd.s32 %v389, %v76
    %v426 = vadd.s32 %v389, %v77
    %v427 = vadd.s32 %v389, %v78
    %v428 = vadd.s32 %v389, %v79
    %v429 = vadd.s32 %v389, %v80
    %v430 = vadd.s32 %v389, %v81
    %v431 = vadd.s32 %v389, %v82
    %v432 = vadd.s32 %v389, %v83
    %v433 = vadd.s32 %v389, %v84
    %v434 = vadd.s32 %v389, %v85
    %v435 = vadd.s32 %v389, %v86
    %v436 = vadd.s32 %v389, %v87
    %v437 = vadd.s32 %v389, %v88
    %v438 = vadd.s32 %v389, %v89
    %v439 = vadd.s32 %v389, %v90
    %v440 = vadd.s32 %v389, %v91
    %v441 = vadd.s32 %v389, %v92
    %v442 = vadd.s32 %v389, %v93
    %v443 = vadd.s32 %v389, %v94
    %v444 = vadd.s32 %v389, %v95
    %v445 = vadd.s32 %v389, %v96
    %v446 = vadd.s32 %v389, %v97
    %v447 = vadd.s32 %v389, %v98
    %v448 = vadd.s32 %v389, %v99
    %v449 = vadd.s32 %v389, %v100
    %v450 = vadd.s32 %v389, %v101
    %v451 = vadd.s32 %v389, %v102
    %v452 = vadd.s32 %v389, %v103
    %v453 = vadd.s32 %v389, %v104
    %v454 = vadd.s32 %v389, %v105
    %v455 = vadd.s32 %v389, %v106
    %v456 = vadd.s32 %v389, %v107
    %v457 = vadd.s32 %v389, %v108
    %v458 = vadd.s32 %v389, %v109
    %v459 = vadd.s32 %v389, %v110
    %v460 = vadd.s32 %v389, %v111
    %v461 = vadd.s32 %v389, %v112
    %v462 = vadd.s32 %v389, %v113
    %v463 = vadd.s32 %v389, %v114
    %v464 = vadd.s32 %v389, %v115
    %v465 = vadd.s32 %v389, %v116
    %v466 = vadd.s32 %v389, %v117
    %v467 = vadd.s32 %v389, %v118
    %v468 = vadd.s32 %v389, %v119
    %v469 = vadd.s32 %v389, %v120
    %v470 = vadd.s32 %v389, %v121
    %v471 = vadd.s32 %v389, %v122
    %v472 = vadd.s32 %v389, %v123
    %v473 = vadd.s32 %v389, %v124
    %v474 = vadd.s32 %v389, %v125
    %v475 = vadd.s32 %v389, %v126
    %v476 = vadd.s32 %v389, %v127
    %v477 = vadd.s32 %v389, %v128
    %v478 = vadd.s32 %v389, %v129
    %v479 = vadd.s32 %v389, %v130
    %v480 = vadd.s32 %v389, %v131
    %v481 = vadd.s32 %v389, %v132
    %v482 = vadd.s32 %v389, %v133
    %v483 = vadd.s32 %v389, %v134
    %v484 = vadd.s32 %v389, %v135
    %v485 = vadd.s32 %v389, %v136
    %v486 = vadd.s32 %v389, %v137
    %v487 = vadd.s32 %v389, %v138
    %v488 = vadd.s32 %v389, %v139
    %v489 = vadd.s32 %v389, %v140
    %v490 = vadd.s32 %v389, %v141
    %v491 = vadd.s32 %v389, %v142
    %v492 = vadd.s32 %v389, %v143
    %v493 = vadd.s32 %v389, %v144
    %v494 = vadd.s32 %v389, %v145
    %v495 = vadd.s32 %v389, %v146
    %v496 = vadd.s32 %v389, %v147
    %v497 = vadd.s32 %v389, %v148
    %v498 = vadd.s32 %v389, %v149
    %v499 = vadd.s32 %v389, %v150
    %v500 = vadd.s32 %v389, %v151
    %v501 = vadd.s32 %v389, %v152
    %v502 = vadd.s32 %v389, %v153
    %v503 = vadd.s32 %v389, %v154
    %v504 = vadd.s32 %v389, %v155
    %v505 = vadd.s32 %v389, %v156
    %v506 = vadd.s32 %v389, %v157
    %v507 = vadd.s32 %v389, %v158
    %v508 = vadd.s32 %v389, %v159
    %v509 = vadd.s32 %v389, %v160
    %v510 = vadd.s32 %v389, %v161
    %v511 = vadd.s32 %v389, %v162
    %v512 = vadd.s32 %v389, %v163
    %v513 = vadd.s32 %v389, %v164
    %v514 = vadd.s32 %v389, %v165
    %v515 = vadd.s32 %v389, %v166
    %v516 = vadd.s32 %v389, %v167
    %v517 = vadd.s32 %v389, %v168
    %v518 = vadd.s32 %v389, %v169
    %v519 = vadd.s32 %v389, %v170
    %v520 = vadd.s32 %v389, %v171
    %v521 = vadd.s32 %v389, %v172
    %v522 = vadd.s32 %v389, %v173
    %v523 = vadd.s32 %v389, %v174
    %v524 = vadd.s32 %v389, %v175
    %v525 = vadd.s32 %v389, %v176
    %v526 = vadd.s32 %v389, %v177
    %v527 = vadd.s32 %v389, %v178
    %v528 = vadd.s32 %v389, %v179
    %v529 = vadd.s32 %v389, %v180
    %v530 = vadd.s32 %v389, %v181
    %v531 = vadd.s32 %v389, %v182
    %v532 = vadd.s32 %v389, %v183
    %v533 = vadd.s32 %v389, %v184
    %v534 = vadd.s32 %v389, %v185
    %v535 = vadd.s32 %v389, %v186
    %v536 = vadd.s32 %v389, %v187
    %v537 = vadd.s32 %v389, %v188
    %v538 = vadd.s32 %v389, %v189
    %v539 = vadd.s32 %v389, %v190
    %v540 = vadd.s32 %v389, %v191
    %v541 = vadd.s32 %v389, %v192
    %v542 = vadd.s32 %v389, %v193
    %v543 = vadd.s32 %v389, %v194
    %v544 = vadd.s32 %v389, %v195
    %v545 = vadd.s32 %v389, %v196
    %v546 = vadd.s32 %v389, %v197
    %v547 = vadd.s32 %v389, %v198
    %v548 = vadd.s32 %v389, %v199
    %v549 = vadd.s32 %v389, %v200
    %v550 = vadd.s32 %v389, %v201
    %v551 = vadd.s32 %v389, %v202
    %v552 = vadd.s32 %v389, %v203
    %v553 = vadd.s32 %v389, %v204
    %v554 = vadd.s32 %v389, %v205
    %v555 = vadd.s32 %v389, %v206
    %v556 = vadd.s32 %v389, %v207
    %v557 = vadd.s32 %v389, %v208
    %v558 = vadd.s32 %v389, %v209
    %v559 = vadd.s32 %v389, %v210
    %v560 = vadd.s32 %v389, %v211
    %v561 = vadd.s32 %v389, %v212
    %v562 = vadd.s32 %v389, %v213
    %v563 = vadd.s32 %v389, %v214
    %v564 = vadd.s32 %v389, %v215
    %v565 = vadd.s32 %v389, %v216
    %v566 = vadd.s32 %v389, %v217
    %v567 = vadd.s32 %v389, %v218
    %v568 = vadd.s32 %v389, %v219
    %v569 = vadd.s32 %v389, %v220
    %v570 = vadd.s32 %v389, %v221
    %v571 = vadd.s32 %v389, %v222
    %v572 = vadd.s32 %v389, %v223
    %v573 = vadd.s32 %v389, %v224
    %v574 = vadd.s32 %v389, %v225
    %v575 = vadd.s32 %v389, %v226
    %v576 = vadd.s32 %v389, %v227
    %v577 = vadd.s32 %v389, %v228
    %v578 = vadd.s32 %v389, %v229
    %v579 = vadd.s32 %v389, %v230
    %v580 = vadd.s32 %v389, %v231
    %v581 = vadd.s32 %v389, %v232
    %v582 = vadd.s32 %v389, %v233
    %v583 = vadd.s32 %v389, %v234
    %v584 = vadd.s32 %v389, %v235
    %v585 = vadd.s32 %v389, %v236
    %v586 = vadd.s32 %v389, %v237
    %v587 = vadd.s32 %v389, %v238
    %v588 = vadd.s32 %v389, %v239
    %v589 = vadd.s32 %v389, %v240
    %v590 = vadd.s32 %v389, %v241
    %v591 = vadd.s32 %v389, %v242
    %v592 = vadd.s32 %v389, %v243
    %v593 = vadd.s32 %v389, %v244
    %v594 = vadd.s32 %v389, %v245
    %v595 = vadd.s32 %v389, %v246
    %v596 = vadd.s32 %v389, %v247
    %v597 = vadd.s32 %v389, %v248
    %v598 = vadd.s32 %v389, %v249
    %v599 = vadd.s32 %v389, %v250
    %v600 = vadd.s32 %v389, %v251
    %v601 = vadd.s32 %v389, %v252
    %v602 = vadd.s32 %v389, %v253
    %v603 = vadd.s32 %v389, %v254
    %v604 = vadd.s32 %v389, %v255
    %v605 = vadd.s32 %v389, %v256
    %v606 = vadd.s32 %v389, %v257
    %v607 = vadd.s32 %v389, %v258
    %v608 = vadd.s32 %v389, %v259
    %v609 = vadd.s32 %v389, %v260
    %v610 = vadd.s32 %v389, %v261
    %v611 = vadd.s32 %v389, %v262
    %v612 = vadd.s32 %v389, %v263
    %v613 = vadd.s32 %v389, %v264
    %v614 = vadd.s32 %v389, %v265
    %v615 = vadd.s32 %v389, %v266
    %v616 = vadd.s32 %v389, %v267
    %v617 = vadd.s32 %v389, %v268
    %v618 = vadd.s32 %v389, %v269
    %v619 = vadd.s32 %v389, %v270
    %v620 = vadd.s32 %v389, %v271
    %v621 = vadd.s32 %v389, %v272
    %v622 = vadd.s32 %v389, %v273
    %v623 = vadd.s32 %v389, %v274
    %v624 = vadd.s32 %v389, %v275
    %v625 = vadd.s32 %v389, %v276
    %v626 = vadd.s32 %v389, %v277
    %v627 = vadd.s32 %v389, %v278
    %v628 = vadd.s32 %v389, %v279
    %v629 = vadd.s32 %v389, %v280
    %v630 = vadd.s32 %v389, %v281
    %v631 = vadd.s32 %v389, %v282
    %v632 = vadd.s32 %v389, %v283
    %v633 = vadd.s32 %v389, %v284
    %v634 = vadd.s32 %v389, %v285
    %v635 = vadd.s32 %v389, %v286
    %v636 = vadd.s32 %v389, %v287
    %v637 = vadd.s32 %v389, %v288
    %v638 = vadd.s32 %v389, %v289
    %v639 = vadd.s32 %v389, %v290
    %v640 = vadd.s32 %v389, %v291
    %v641 = vadd.s32 %v389, %v292
    %v642 = vadd.s32 %v389, %v293
    %v643 = vadd.s32 %v389, %v294
    %v644 = vadd.s32 %v389, %v295
    %v645 = vadd.s32 %v389, %v296
    %v646 = vadd.s32 %v389, %v297
    %v647 = vadd.s32 %v389, %v298
    %v648 = vadd.s32 %v389, %v299
    %v649 = vadd.s32 %v389, %v300
    %v650 = vadd.s32 %v389, %v301
    %v651 = vadd.s32 %v389, %v302
    %v652 = vadd.s32 %v389, %v303
    %v653 = vadd.s32 %v389, %v304
    %v654 = vadd.s32 %v389, %v305
    %v655 = vadd.s32 %v389, %v306
    %v656 = vadd.s32 %v389, %v307
    %v657 = vadd.s32 %v389, %v308
    %v658 = vadd.s32 %v389, %v309
    %v659 = vadd.s32 %v389, %v310
    %v660 = vadd.s32 %v389, %v311
    %v661 = vadd.s32 %v389, %v312
    %v662 = vadd.s32 %v389, %v313
    %v663 = vadd.s32 %v389, %v314
    %v664 = vadd.s32 %v389, %v315
    %v665 = vadd.s32 %v389, %v316
    %v666 = vadd.s32 %v389, %v317
    %v667 = vadd.s32 %v389, %v318
    %v668 = vadd.s32 %v389, %v319
    %v669 = vadd.s32 %v389, %v320
    %v670 = vadd.s32 %v389, %v321
    %v671 = vadd.s32 %v389, %v322
    %v672 = vadd.s32 %v389, %v323
    %v673 = vadd.s32 %v389, %v324
    %v674 = vadd.s32 %v389, %v325
    %v675 = vadd.s32 %v389, %v326
    %v676 = vadd.s32 %v389, %v327
    %v677 = vadd.s32 %v389, %v328
    %v678 = vadd.s32 %v389, %v329
    %v679 = vadd.s32 %v389, %v330
    %v680 = vadd.s32 %v389, %v331
    %v681 = vadd.s32 %v389, %v332
    %v682 = vadd.s32 %v389, %v333
    %v683 = vadd.s32 %v389, %v334
    %v684 = vadd.s32 %v389, %v335
    %v685 = vadd.s32 %v389, %v336
    %v686 = vadd.s32 %v389, %v337
    %v687 = vadd.s32 %v389, %v338
    %v688 = vadd.s32 %v389, %v339
    %v689 = vadd.s32 %v389, %v340
    %v690 = vadd.s32 %v389, %v341
    %v691 = vadd.s32 %v389, %v342
    %v692 = vadd.s32 %v389, %v343
    %v693 = vadd.s32 %v389, %v344
    %v694 = vadd.s32 %v389, %v345
    %v695 = vadd.s32 %v389, %v346
    %v696 = vadd.s32 %v389, %v347
    %v697 = vadd.s32 %v389, %v348
    %v698 = vadd.s32 %v389, %v349
    %v699 = vadd.s32 %v389, %v350
    %v700 = vadd.s32 %v389, %v351
    %v701 = vadd.s32 %v389, %v352
    %v702 = vadd.s32 %v389, %v353
    %v703 = vadd.s32 %v389, %v354
    %v704 = vadd.s32 %v389, %v355
    %v705 = vadd.s32 %v389, %v356
    %v706 = vadd.s32 %v389, %v357
    %v707 = vadd.s32 %v389, %v358
    %v708 = vadd.s32 %v389, %v359
    %v709 = vadd.s32 %v389, %v360
    %v710 = vadd.s32 %v389, %v361
    %v711 = vadd.s32 %v389, %v362
    %v712 = vadd.s32 %v389, %v363
    %v713 = vadd.s32 %v389, %v364
    %v714 = vadd.s32 %v389, %v365
    %v715 = vadd.s32 %v389, %v366
    %v716 = vadd.s32 %v389, %v367
    %v717 = vadd.s32 %v389, %v368
    %v718 = vadd.s32 %v389, %v369
    %v719 = vadd.s32 %v389, %v370
    %v720 = vadd.s32 %v389, %v371
    %v721 = vadd.s32 %v389, %v372
    %v722 = vadd.s32 %v389, %v373
    %v723 = vadd.s32 %v389, %v374
    %v724 = vadd.s32 %v389, %v375
    %v725 = vadd.s32 %v389, %v376
    %v726 = vadd.s32 %v389, %v377
    %v727 = vadd.s32 %v389, %v378
    %v728 = vadd.s32 %v389, %v379
    %v729 = vadd.s32 %v389, %v380
    %v730 = vadd.s32 %v389, %v381
    %v731 = vadd.s32 %v389, %v382
    %v732 = vadd.s32 %v389, %v383
    %v733 = vadd.s32 %v389, %v384
    %v734 = vadd.s32 %v389, %v385
    %v735 = vadd.s32 %v389, %v386
    %v736 = vadd.s32 %v389, %v387
    %v737 = vadd.s32 %v389, %v388
    %vm738 = vcmp.lt.s32.totalorder %v390, 2777
    %vm739 = vcmp.lt.s32.totalorder %v391, 2777
    %vm740 = vcmp.lt.s32.totalorder %v392, 2777
    %vm741 = vcmp.lt.s32.totalorder %v393, 2777
    %vm742 = vcmp.lt.s32.totalorder %v394, 2777
    %vm743 = vcmp.lt.s32.totalorder %v395, 2777
    %vm744 = vcmp.lt.s32.totalorder %v396, 2777
    %vm745 = vcmp.lt.s32.totalorder %v397, 2777
    %vm746 = vcmp.lt.s32.totalorder %v398, 2777
    %vm747 = vcmp.lt.s32.totalorder %v399, 2777
    %vm748 = vcmp.lt.s32.totalorder %v400, 2777
    %vm749 = vcmp.lt.s32.totalorder %v401, 2777
    %vm750 = vcmp.lt.s32.totalorder %v402, 2777
    %vm751 = vcmp.lt.s32.totalorder %v403, 2777
    %vm752 = vcmp.lt.s32.totalorder %v404, 2777
    %vm753 = vcmp.lt.s32.totalorder %v405, 2777
    %vm754 = vcmp.lt.s32.totalorder %v406, 2777
    %vm755 = vcmp.lt.s32.totalorder %v407, 2777
    %vm756 = vcmp.lt.s32.totalorder %v408, 2777
    %vm757 = vcmp.lt.s32.totalorder %v409, 2777
    %vm758 = vcmp.lt.s32.totalorder %v410, 2777
    %vm759 = vcmp.lt.s32.totalorder %v411, 2777
    %vm760 = vcmp.lt.s32.totalorder %v412, 2777
    %vm761 = vcmp.lt.s32.totalorder %v413, 2777
    %vm762 = vcmp.lt.s32.totalorder %v414, 2777
    %vm763 = vcmp.lt.s32.totalorder %v415, 2777
    %vm764 = vcmp.lt.s32.totalorder %v416, 2777
    %vm765 = vcmp.lt.s32.totalorder %v417, 2777
    %vm766 = vcmp.lt.s32.totalorder %v418, 2777
    %vm767 = vcmp.lt.s32.totalorder %v419, 2777
    %vm768 = vcmp.lt.s32.totalorder %v420, 2777
    %vm769 = vcmp.lt.s32.totalorder %v421, 2777
    %vm770 = vcmp.lt.s32.totalorder %v422, 2777
    %vm771 = vcmp.lt.s32.totalorder %v423, 2777
    %vm772 = vcmp.lt.s32.totalorder %v424, 2777
    %vm773 = vcmp.lt.s32.totalorder %v425, 2777
    %vm774 = vcmp.lt.s32.totalorder %v426, 2777
    %vm775 = vcmp.lt.s32.totalorder %v427, 2777
    %vm776 = vcmp.lt.s32.totalorder %v428, 2777
    %vm777 = vcmp.lt.s32.totalorder %v429, 2777
    %vm778 = vcmp.lt.s32.totalorder %v430, 2777
    %vm779 = vcmp.lt.s32.totalorder %v431, 2777
    %vm780 = vcmp.lt.s32.totalorder %v432, 2777
    %vm781 = vcmp.lt.s32.totalorder %v433, 2777
    %vm782 = vcmp.lt.s32.totalorder %v434, 2777
    %vm783 = vcmp.lt.s32.totalorder %v435, 2777
    %vm784 = vcmp.lt.s32.totalorder %v436, 2777
    %vm785 = vcmp.lt.s32.totalorder %v437, 2777
    %vm786 = vcmp.lt.s32.totalorder %v438, 2777
    %vm787 = vcmp.lt.s32.totalorder %v439, 2777
    %vm788 = vcmp.lt.s32.totalorder %v440, 2777
    %vm789 = vcmp.lt.s32.totalorder %v441, 2777
    %vm790 = vcmp.lt.s32.totalorder %v442, 2777
    %vm791 = vcmp.lt.s32.totalorder %v443, 2777
    %vm792 = vcmp.lt.s32.totalorder %v444, 2777
    %vm793 = vcmp.lt.s32.totalorder %v445, 2777
    %vm794 = vcmp.lt.s32.totalorder %v446, 2777
    %vm795 = vcmp.lt.s32.totalorder %v447, 2777
    %vm796 = vcmp.lt.s32.totalorder %v448, 2777
    %vm797 = vcmp.lt.s32.totalorder %v449, 2777
    %vm798 = vcmp.lt.s32.totalorder %v450, 2777
    %vm799 = vcmp.lt.s32.totalorder %v451, 2777
    %vm800 = vcmp.lt.s32.totalorder %v452, 2777
    %vm801 = vcmp.lt.s32.totalorder %v453, 2777
    %vm802 = vcmp.lt.s32.totalorder %v454, 2777
    %vm803 = vcmp.lt.s32.totalorder %v455, 2777
    %vm804 = vcmp.lt.s32.totalorder %v456, 2777
    %vm805 = vcmp.lt.s32.totalorder %v457, 2777
    %vm806 = vcmp.lt.s32.totalorder %v458, 2777
    %vm807 = vcmp.lt.s32.totalorder %v459, 2777
    %vm808 = vcmp.lt.s32.totalorder %v460, 2777
    %vm809 = vcmp.lt.s32.totalorder %v461, 2777
    %vm810 = vcmp.lt.s32.totalorder %v462, 2777
    %vm811 = vcmp.lt.s32.totalorder %v463, 2777
    %vm812 = vcmp.lt.s32.totalorder %v464, 2777
    %vm813 = vcmp.lt.s32.totalorder %v465, 2777
    %vm814 = vcmp.lt.s32.totalorder %v466, 2777
    %vm815 = vcmp.lt.s32.totalorder %v467, 2777
    %vm816 = vcmp.lt.s32.totalorder %v468, 2777
    %vm817 = vcmp.lt.s32.totalorder %v469, 2777
    %vm818 = vcmp.lt.s32.totalorder %v470, 2777
    %vm819 = vcmp.lt.s32.totalorder %v471, 2777
    %vm820 = vcmp.lt.s32.totalorder %v472, 2777
    %vm821 = vcmp.lt.s32.totalorder %v473, 2777
    %vm822 = vcmp.lt.s32.totalorder %v474, 2777
    %vm823 = vcmp.lt.s32.totalorder %v475, 2777
    %vm824 = vcmp.lt.s32.totalorder %v476, 2777
    %vm825 = vcmp.lt.s32.totalorder %v477, 2777
    %vm826 = vcmp.lt.s32.totalorder %v478, 2777
    %vm827 = vcmp.lt.s32.totalorder %v479, 2777
    %vm828 = vcmp.lt.s32.totalorder %v480, 2777
    %vm829 = vcmp.lt.s32.totalorder %v481, 2777
    %vm830 = vcmp.lt.s32.totalorder %v482, 2777
    %vm831 = vcmp.lt.s32.totalorder %v483, 2777
    %vm832 = vcmp.lt.s32.totalorder %v484, 2777
    %vm833 = vcmp.lt.s32.totalorder %v485, 2777
    %vm834 = vcmp.lt.s32.totalorder %v486, 2777
    %vm835 = vcmp.lt.s32.totalorder %v487, 2777
    %vm836 = vcmp.lt.s32.totalorder %v488, 2777
    %vm837 = vcmp.lt.s32.totalorder %v489, 2777
    %vm838 = vcmp.lt.s32.totalorder %v490, 2777
    %vm839 = vcmp.lt.s32.totalorder %v491, 2777
    %vm840 = vcmp.lt.s32.totalorder %v492, 2777
    %vm841 = vcmp.lt.s32.totalorder %v493, 2777
    %vm842 = vcmp.lt.s32.totalorder %v494, 2777
    %vm843 = vcmp.lt.s32.totalorder %v495, 2777
    %vm844 = vcmp.lt.s32.totalorder %v496, 2777
    %vm845 = vcmp.lt.s32.totalorder %v497, 2777
    %vm846 = vcmp.lt.s32.totalorder %v498, 2777
    %vm847 = vcmp.lt.s32.totalorder %v499, 2777
    %vm848 = vcmp.lt.s32.totalorder %v500, 2777
    %vm849 = vcmp.lt.s32.totalorder %v501, 2777
    %vm850 = vcmp.lt.s32.totalorder %v502, 2777
    %vm851 = vcmp.lt.s32.totalorder %v503, 2777
    %vm852 = vcmp.lt.s32.totalorder %v504, 2777
    %vm853 = vcmp.lt.s32.totalorder %v505, 2777
    %vm854 = vcmp.lt.s32.totalorder %v506, 2777
    %vm855 = vcmp.lt.s32.totalorder %v507, 2777
    %vm856 = vcmp.lt.s32.totalorder %v508, 2777
    %vm857 = vcmp.lt.s32.totalorder %v509, 2777
    %vm858 = vcmp.lt.s32.totalorder %v510, 2777
    %vm859 = vcmp.lt.s32.totalorder %v511, 2777
    %vm860 = vcmp.lt.s32.totalorder %v512, 2777
    %vm861 = vcmp.lt.s32.totalorder %v513, 2777
    %vm862 = vcmp.lt.s32.totalorder %v514, 2777
    %vm863 = vcmp.lt.s32.totalorder %v515, 2777
    %vm864 = vcmp.lt.s32.totalorder %v516, 2777
    %vm865 = vcmp.lt.s32.totalorder %v517, 2777
    %vm866 = vcmp.lt.s32.totalorder %v518, 2777
    %vm867 = vcmp.lt.s32.totalorder %v519, 2777
    %vm868 = vcmp.lt.s32.totalorder %v520, 2777
    %vm869 = vcmp.lt.s32.totalorder %v521, 2777
    %vm870 = vcmp.lt.s32.totalorder %v522, 2777
    %vm871 = vcmp.lt.s32.totalorder %v523, 2777
    %vm872 = vcmp.lt.s32.totalorder %v524, 2777
    %vm873 = vcmp.lt.s32.totalorder %v525, 2777
    %vm874 = vcmp.lt.s32.totalorder %v526, 2777
    %vm875 = vcmp.lt.s32.totalorder %v527, 2777
    %vm876 = vcmp.lt.s32.totalorder %v528, 2777
    %vm877 = vcmp.lt.s32.totalorder %v529, 2777
    %vm878 = vcmp.lt.s32.totalorder %v530, 2777
    %vm879 = vcmp.lt.s32.totalorder %v531, 2777
    %vm880 = vcmp.lt.s32.totalorder %v532, 2777
    %vm881 = vcmp.lt.s32.totalorder %v533, 2777
    %vm882 = vcmp.lt.s32.totalorder %v534, 2777
    %vm883 = vcmp.lt.s32.totalorder %v535, 2777
    %vm884 = vcmp.lt.s32.totalorder %v536, 2777
    %vm885 = vcmp.lt.s32.totalorder %v537, 2777
    %vm886 = vcmp.lt.s32.totalorder %v538, 2777
    %vm887 = vcmp.lt.s32.totalorder %v539, 2777
    %vm888 = vcmp.lt.s32.totalorder %v540, 2777
    %vm889 = vcmp.lt.s32.totalorder %v541, 2777
    %vm890 = vcmp.lt.s32.totalorder %v542, 2777
    %vm891 = vcmp.lt.s32.totalorder %v543, 2777
    %vm892 = vcmp.lt.s32.totalorder %v544, 2777
    %vm893 = vcmp.lt.s32.totalorder %v545, 2777
    %vm894 = vcmp.lt.s32.totalorder %v546, 2777
    %vm895 = vcmp.lt.s32.totalorder %v547, 2777
    %vm896 = vcmp.lt.s32.totalorder %v548, 2777
    %vm897 = vcmp.lt.s32.totalorder %v549, 2777
    %vm898 = vcmp.lt.s32.totalorder %v550, 2777
    %vm899 = vcmp.lt.s32.totalorder %v551, 2777
    %vm900 = vcmp.lt.s32.totalorder %v552, 2777
    %vm901 = vcmp.lt.s32.totalorder %v553, 2777
    %vm902 = vcmp.lt.s32.totalorder %v554, 2777
    %vm903 = vcmp.lt.s32.totalorder %v555, 2777
    %vm904 = vcmp.lt.s32.totalorder %v556, 2777
    %vm905 = vcmp.lt.s32.totalorder %v557, 2777
    %vm906 = vcmp.lt.s32.totalorder %v558, 2777
    %vm907 = vcmp.lt.s32.totalorder %v559, 2777
    %vm908 = vcmp.lt.s32.totalorder %v560, 2777
    %vm909 = vcmp.lt.s32.totalorder %v561, 2777
    %vm910 = vcmp.lt.s32.totalorder %v562, 2777
    %vm911 = vcmp.lt.s32.totalorder %v563, 2777
    %vm912 = vcmp.lt.s32.totalorder %v564, 2777
    %vm913 = vcmp.lt.s32.totalorder %v565, 2777
    %vm914 = vcmp.lt.s32.totalorder %v566, 2777
    %vm915 = vcmp.lt.s32.totalorder %v567, 2777
    %vm916 = vcmp.lt.s32.totalorder %v568, 2777
    %vm917 = vcmp.lt.s32.totalorder %v569, 2777
    %vm918 = vcmp.lt.s32.totalorder %v570, 2777
    %vm919 = vcmp.lt.s32.totalorder %v571, 2777
    %vm920 = vcmp.lt.s32.totalorder %v572, 2777
    %vm921 = vcmp.lt.s32.totalorder %v573, 2777
    %vm922 = vcmp.lt.s32.totalorder %v574, 2777
    %vm923 = vcmp.lt.s32.totalorder %v575, 2777
    %vm924 = vcmp.lt.s32.totalorder %v576, 2777
    %vm925 = vcmp.lt.s32.totalorder %v577, 2777
    %vm926 = vcmp.lt.s32.totalorder %v578, 2777
    %vm927 = vcmp.lt.s32.totalorder %v579, 2777
    %vm928 = vcmp.lt.s32.totalorder %v580, 2777
    %vm929 = vcmp.lt.s32.totalorder %v581, 2777
    %vm930 = vcmp.lt.s32.totalorder %v582, 2777
    %vm931 = vcmp.lt.s32.totalorder %v583, 2777
    %vm932 = vcmp.lt.s32.totalorder %v584, 2777
    %vm933 = vcmp.lt.s32.totalorder %v585, 2777
    %vm934 = vcmp.lt.s32.totalorder %v586, 2777
    %vm935 = vcmp.lt.s32.totalorder %v587, 2777
    %vm936 = vcmp.lt.s32.totalorder %v588, 2777
    %vm937 = vcmp.lt.s32.totalorder %v589, 2777
    %vm938 = vcmp.lt.s32.totalorder %v590, 2777
    %vm939 = vcmp.lt.s32.totalorder %v591, 2777
    %vm940 = vcmp.lt.s32.totalorder %v592, 2777
    %vm941 = vcmp.lt.s32.totalorder %v593, 2777
    %vm942 = vcmp.lt.s32.totalorder %v594, 2777
    %vm943 = vcmp.lt.s32.totalorder %v595, 2777
    %vm944 = vcmp.lt.s32.totalorder %v596, 2777
    %vm945 = vcmp.lt.s32.totalorder %v597, 2777
    %vm946 = vcmp.lt.s32.totalorder %v598, 2777
    %vm947 = vcmp.lt.s32.totalorder %v599, 2777
    %vm948 = vcmp.lt.s32.totalorder %v600, 2777
    %vm949 = vcmp.lt.s32.totalorder %v601, 2777
    %vm950 = vcmp.lt.s32.totalorder %v602, 2777
    %vm951 = vcmp.lt.s32.totalorder %v603, 2777
    %vm952 = vcmp.lt.s32.totalorder %v604, 2777
    %vm953 = vcmp.lt.s32.totalorder %v605, 2777
    %vm954 = vcmp.lt.s32.totalorder %v606, 2777
    %vm955 = vcmp.lt.s32.totalorder %v607, 2777
    %vm956 = vcmp.lt.s32.totalorder %v608, 2777
    %vm957 = vcmp.lt.s32.totalorder %v609, 2777
    %vm958 = vcmp.lt.s32.totalorder %v610, 2777
    %vm959 = vcmp.lt.s32.totalorder %v611, 2777
    %vm960 = vcmp.lt.s32.totalorder %v612, 2777
    %vm961 = vcmp.lt.s32.totalorder %v613, 2777
    %vm962 = vcmp.lt.s32.totalorder %v614, 2777
    %vm963 = vcmp.lt.s32.totalorder %v615, 2777
    %vm964 = vcmp.lt.s32.totalorder %v616, 2777
    %vm965 = vcmp.lt.s32.totalorder %v617, 2777
    %vm966 = vcmp.lt.s32.totalorder %v618, 2777
    %vm967 = vcmp.lt.s32.totalorder %v619, 2777
    %vm968 = vcmp.lt.s32.totalorder %v620, 2777
    %vm969 = vcmp.lt.s32.totalorder %v621, 2777
    %vm970 = vcmp.lt.s32.totalorder %v622, 2777
    %vm971 = vcmp.lt.s32.totalorder %v623, 2777
    %vm972 = vcmp.lt.s32.totalorder %v624, 2777
    %vm973 = vcmp.lt.s32.totalorder %v625, 2777
    %vm974 = vcmp.lt.s32.totalorder %v626, 2777
    %vm975 = vcmp.lt.s32.totalorder %v627, 2777
    %vm976 = vcmp.lt.s32.totalorder %v628, 2777
    %vm977 = vcmp.lt.s32.totalorder %v629, 2777
    %vm978 = vcmp.lt.s32.totalorder %v630, 2777
    %vm979 = vcmp.lt.s32.totalorder %v631, 2777
    %vm980 = vcmp.lt.s32.totalorder %v632, 2777
    %vm981 = vcmp.lt.s32.totalorder %v633, 2777
    %vm982 = vcmp.lt.s32.totalorder %v634, 2777
    %vm983 = vcmp.lt.s32.totalorder %v635, 2777
    %vm984 = vcmp.lt.s32.totalorder %v636, 2777
    %vm985 = vcmp.lt.s32.totalorder %v637, 2777
    %vm986 = vcmp.lt.s32.totalorder %v638, 2777
    %vm987 = vcmp.lt.s32.totalorder %v639, 2777
    %vm988 = vcmp.lt.s32.totalorder %v640, 2777
    %vm989 = vcmp.lt.s32.totalorder %v641, 2777
    %vm990 = vcmp.lt.s32.totalorder %v642, 2777
    %vm991 = vcmp.lt.s32.totalorder %v643, 2777
    %vm992 = vcmp.lt.s32.totalorder %v644, 2777
    %vm993 = vcmp.lt.s32.totalorder %v645, 2777
    %vm994 = vcmp.lt.s32.totalorder %v646, 2777
    %vm995 = vcmp.lt.s32.totalorder %v647, 2777
    %vm996 = vcmp.lt.s32.totalorder %v648, 2777
    %vm997 = vcmp.lt.s32.totalorder %v649, 2777
    %vm998 = vcmp.lt.s32.totalorder %v650, 2777
    %vm999 = vcmp.lt.s32.totalorder %v651, 2777
    %vm1000 = vcmp.lt.s32.totalorder %v652, 2777
    %vm1001 = vcmp.lt.s32.totalorder %v653, 2777
    %vm1002 = vcmp.lt.s32.totalorder %v654, 2777
    %vm1003 = vcmp.lt.s32.totalorder %v655, 2777
    %vm1004 = vcmp.lt.s32.totalorder %v656, 2777
    %vm1005 = vcmp.lt.s32.totalorder %v657, 2777
    %vm1006 = vcmp.lt.s32.totalorder %v658, 2777
    %vm1007 = vcmp.lt.s32.totalorder %v659, 2777
    %vm1008 = vcmp.lt.s32.totalorder %v660, 2777
    %vm1009 = vcmp.lt.s32.totalorder %v661, 2777
    %vm1010 = vcmp.lt.s32.totalorder %v662, 2777
    %vm1011 = vcmp.lt.s32.totalorder %v663, 2777
    %vm1012 = vcmp.lt.s32.totalorder %v664, 2777
    %vm1013 = vcmp.lt.s32.totalorder %v665, 2777
    %vm1014 = vcmp.lt.s32.totalorder %v666, 2777
    %vm1015 = vcmp.lt.s32.totalorder %v667, 2777
    %vm1016 = vcmp.lt.s32.totalorder %v668, 2777
    %vm1017 = vcmp.lt.s32.totalorder %v669, 2777
    %vm1018 = vcmp.lt.s32.totalorder %v670, 2777
    %vm1019 = vcmp.lt.s32.totalorder %v671, 2777
    %vm1020 = vcmp.lt.s32.totalorder %v672, 2777
    %vm1021 = vcmp.lt.s32.totalorder %v673, 2777
    %vm1022 = vcmp.lt.s32.totalorder %v674, 2777
    %vm1023 = vcmp.lt.s32.totalorder %v675, 2777
    %vm1024 = vcmp.lt.s32.totalorder %v676, 2777
    %vm1025 = vcmp.lt.s32.totalorder %v677, 2777
    %vm1026 = vcmp.lt.s32.totalorder %v678, 2777
    %vm1027 = vcmp.lt.s32.totalorder %v679, 2777
    %vm1028 = vcmp.lt.s32.totalorder %v680, 2777
    %vm1029 = vcmp.lt.s32.totalorder %v681, 2777
    %vm1030 = vcmp.lt.s32.totalorder %v682, 2777
    %vm1031 = vcmp.lt.s32.totalorder %v683, 2777
    %vm1032 = vcmp.lt.s32.totalorder %v684, 2777
    %vm1033 = vcmp.lt.s32.totalorder %v685, 2777
    %vm1034 = vcmp.lt.s32.totalorder %v686, 2777
    %vm1035 = vcmp.lt.s32.totalorder %v687, 2777
    %vm1036 = vcmp.lt.s32.totalorder %v688, 2777
    %vm1037 = vcmp.lt.s32.totalorder %v689, 2777
    %vm1038 = vcmp.lt.s32.totalorder %v690, 2777
    %vm1039 = vcmp.lt.s32.totalorder %v691, 2777
    %vm1040 = vcmp.lt.s32.totalorder %v692, 2777
    %vm1041 = vcmp.lt.s32.totalorder %v693, 2777
    %vm1042 = vcmp.lt.s32.totalorder %v694, 2777
    %vm1043 = vcmp.lt.s32.totalorder %v695, 2777
    %vm1044 = vcmp.lt.s32.totalorder %v696, 2777
    %vm1045 = vcmp.lt.s32.totalorder %v697, 2777
    %vm1046 = vcmp.lt.s32.totalorder %v698, 2777
    %vm1047 = vcmp.lt.s32.totalorder %v699, 2777
    %vm1048 = vcmp.lt.s32.totalorder %v700, 2777
    %vm1049 = vcmp.lt.s32.totalorder %v701, 2777
    %vm1050 = vcmp.lt.s32.totalorder %v702, 2777
    %vm1051 = vcmp.lt.s32.totalorder %v703, 2777
    %vm1052 = vcmp.lt.s32.totalorder %v704, 2777
    %vm1053 = vcmp.lt.s32.totalorder %v705, 2777
    %vm1054 = vcmp.lt.s32.totalorder %v706, 2777
    %vm1055 = vcmp.lt.s32.totalorder %v707, 2777
    %vm1056 = vcmp.lt.s32.totalorder %v708, 2777
    %vm1057 = vcmp.lt.s32.totalorder %v709, 2777
    %vm1058 = vcmp.lt.s32.totalorder %v710, 2777
    %vm1059 = vcmp.lt.s32.totalorder %v711, 2777
    %vm1060 = vcmp.lt.s32.totalorder %v712, 2777
    %vm1061 = vcmp.lt.s32.totalorder %v713, 2777
    %vm1062 = vcmp.lt.s32.totalorder %v714, 2777
    %vm1063 = vcmp.lt.s32.totalorder %v715, 2777
    %vm1064 = vcmp.lt.s32.totalorder %v716, 2777
    %vm1065 = vcmp.lt.s32.totalorder %v717, 2777
    %vm1066 = vcmp.lt.s32.totalorder %v718, 2777
    %vm1067 = vcmp.lt.s32.totalorder %v719, 2777
    %vm1068 = vcmp.lt.s32.totalorder %v720, 2777
    %vm1069 = vcmp.lt.s32.totalorder %v721, 2777
    %vm1070 = vcmp.lt.s32.totalorder %v722, 2777
    %vm1071 = vcmp.lt.s32.totalorder %v723, 2777
    %vm1072 = vcmp.lt.s32.totalorder %v724, 2777
    %vm1073 = vcmp.lt.s32.totalorder %v725, 2777
    %vm1074 = vcmp.lt.s32.totalorder %v726, 2777
    %vm1075 = vcmp.lt.s32.totalorder %v727, 2777
    %vm1076 = vcmp.lt.s32.totalorder %v728, 2777
    %vm1077 = vcmp.lt.s32.totalorder %v729, 2777
    %vm1078 = vcmp.lt.s32.totalorder %v730, 2777
    %vm1079 = vcmp.lt.s32.totalorder %v731, 2777
    %vm1080 = vcmp.lt.s32.totalorder %v732, 2777
    %vm1081 = vcmp.lt.s32.totalorder %v733, 2777
    %vm1082 = vcmp.lt.s32.totalorder %v734, 2777
    %vm1083 = vcmp.lt.s32.totalorder %v735, 2777
    %vm1084 = vcmp.lt.s32.totalorder %v736, 2777
    %vm1085 = vcmp.lt.s32.totalorder %v737, 2777
    %v1086 = vld [vmem:[#allocation2] sm:$0xff]
    %v1087 = vld [vmem:[#allocation2 + $0x8] sm:$0xff]
    %v1088 = vld [vmem:[#allocation2 + $0x10] sm:$0xff]
    %v1089 = vld [vmem:[#allocation2 + $0x18] sm:$0xff]
    %v1090 = vld [vmem:[#allocation2 + $0x20] sm:$0xff]
    %v1091 = vld [vmem:[#allocation2 + $0x28] sm:$0xff]
    %v1092 = vld [vmem:[#allocation2 + $0x30] sm:$0xff]
    %v1093 = vld [vmem:[#allocation2 + $0x38] sm:$0xff]
    %v1094 = vld [vmem:[#allocation2 + $0x40] sm:$0xff]
    %v1095 = vld [vmem:[#allocation2 + $0x48] sm:$0xff]
    %v1096 = vld [vmem:[#allocation2 + $0x50] sm:$0xff]
    %v1097 = vld [vmem:[#allocation2 + $0x58] sm:$0xff]
    %v1098 = vld [vmem:[#allocation2 + $0x60] sm:$0xff]
    %v1099 = vld [vmem:[#allocation2 + $0x68] sm:$0xff]
    %v1100 = vld [vmem:[#allocation2 + $0x70] sm:$0xff]
    %v1101 = vld [vmem:[#allocation2 + $0x78] sm:$0xff]
    %v1102 = vld [vmem:[#allocation2 + $0x80] sm:$0xff]
    %v1103 = vld [vmem:[#allocation2 + $0x88] sm:$0xff]
    %v1104 = vld [vmem:[#allocation2 + $0x90] sm:$0xff]
    %v1105 = vld [vmem:[#allocation2 + $0x98] sm:$0xff]
    %v1106 = vld [vmem:[#allocation2 + $0xa0] sm:$0xff]
    %v1107 = vld [vmem:[#allocation2 + $0xa8] sm:$0xff]
    %v1108 = vld [vmem:[#allocation2 + $0xb0] sm:$0xff]
    %v1109 = vld [vmem:[#allocation2 + $0xb8] sm:$0xff]
    %v1110 = vld [vmem:[#allocation2 + $0xc0] sm:$0xff]
    %v1111 = vld [vmem:[#allocation2 + $0xc8] sm:$0xff]
    %v1112 = vld [vmem:[#allocation2 + $0xd0] sm:$0xff]
    %v1113 = vld [vmem:[#allocation2 + $0xd8] sm:$0xff]
    %v1114 = vld [vmem:[#allocation2 + $0xe0] sm:$0xff]
    %v1115 = vld [vmem:[#allocation2 + $0xe8] sm:$0xff]
    %v1116 = vld [vmem:[#allocation2 + $0xf0] sm:$0xff]
    %v1117 = vld [vmem:[#allocation2 + $0xf8] sm:$0xff]
    %v1118 = vld [vmem:[#allocation2 + $0x100] sm:$0xff]
    %v1119 = vld [vmem:[#allocation2 + $0x108] sm:$0xff]
    %v1120 = vld [vmem:[#allocation2 + $0x110] sm:$0xff]
    %v1121 = vld [vmem:[#allocation2 + $0x118] sm:$0xff]
    %v1122 = vld [vmem:[#allocation2 + $0x120] sm:$0xff]
    %v1123 = vld [vmem:[#allocation2 + $0x128] sm:$0xff]
    %v1124 = vld [vmem:[#allocation2 + $0x130] sm:$0xff]
    %v1125 = vld [vmem:[#allocation2 + $0x138] sm:$0xff]
    %v1126 = vld [vmem:[#allocation2 + $0x140] sm:$0xff]
    %v1127 = vld [vmem:[#allocation2 + $0x148] sm:$0xff]
    %v1128 = vld [vmem:[#allocation2 + $0x150] sm:$0xff]
    %v1129 = vld [vmem:[#allocation2 + $0x158] sm:$0xff]
    %v1130 = vld [vmem:[#allocation2 + $0x160] sm:$0xff]
    %v1131 = vld [vmem:[#allocation2 + $0x168] sm:$0xff]
    %v1132 = vld [vmem:[#allocation2 + $0x170] sm:$0xff]
    %v1133 = vld [vmem:[#allocation2 + $0x178] sm:$0xff]
    %v1134 = vld [vmem:[#allocation2 + $0x180] sm:$0xff]
    %v1135 = vld [vmem:[#allocation2 + $0x188] sm:$0xff]
    %v1136 = vld [vmem:[#allocation2 + $0x190] sm:$0xff]
    %v1137 = vld [vmem:[#allocation2 + $0x198] sm:$0xff]
    %v1138 = vld [vmem:[#allocation2 + $0x1a0] sm:$0xff]
    %v1139 = vld [vmem:[#allocation2 + $0x1a8] sm:$0xff]
    %v1140 = vld [vmem:[#allocation2 + $0x1b0] sm:$0xff]
    %v1141 = vld [vmem:[#allocation2 + $0x1b8] sm:$0xff]
    %v1142 = vld [vmem:[#allocation2 + $0x1c0] sm:$0xff]
    %v1143 = vld [vmem:[#allocation2 + $0x1c8] sm:$0xff]
    %v1144 = vld [vmem:[#allocation2 + $0x1d0] sm:$0xff]
    %v1145 = vld [vmem:[#allocation2 + $0x1d8] sm:$0xff]
    %v1146 = vld [vmem:[#allocation2 + $0x1e0] sm:$0xff]
    %v1147 = vld [vmem:[#allocation2 + $0x1e8] sm:$0xff]
    %v1148 = vld [vmem:[#allocation2 + $0x1f0] sm:$0xff]
    %v1149 = vld [vmem:[#allocation2 + $0x1f8] sm:$0xff]
    %v1150 = vld [vmem:[#allocation2 + $0x200] sm:$0xff]
    %v1151 = vld [vmem:[#allocation2 + $0x208] sm:$0xff]
    %v1152 = vld [vmem:[#allocation2 + $0x210] sm:$0xff]
    %v1153 = vld [vmem:[#allocation2 + $0x218] sm:$0xff]
    %v1154 = vld [vmem:[#allocation2 + $0x220] sm:$0xff]
    %v1155 = vld [vmem:[#allocation2 + $0x228] sm:$0xff]
    %v1156 = vld [vmem:[#allocation2 + $0x230] sm:$0xff]
    %v1157 = vld [vmem:[#allocation2 + $0x238] sm:$0xff]
    %v1158 = vld [vmem:[#allocation2 + $0x240] sm:$0xff]
    %v1159 = vld [vmem:[#allocation2 + $0x248] sm:$0xff]
    %v1160 = vld [vmem:[#allocation2 + $0x250] sm:$0xff]
    %v1161 = vld [vmem:[#allocation2 + $0x258] sm:$0xff]
    %v1162 = vld [vmem:[#allocation2 + $0x260] sm:$0xff]
    %v1163 = vld [vmem:[#allocation2 + $0x268] sm:$0xff]
    %v1164 = vld [vmem:[#allocation2 + $0x270] sm:$0xff]
    %v1165 = vld [vmem:[#allocation2 + $0x278] sm:$0xff]
    %v1166 = vld [vmem:[#allocation2 + $0x280] sm:$0xff]
    %v1167 = vld [vmem:[#allocation2 + $0x288] sm:$0xff]
    %v1168 = vld [vmem:[#allocation2 + $0x290] sm:$0xff]
    %v1169 = vld [vmem:[#allocation2 + $0x298] sm:$0xff]
    %v1170 = vld [vmem:[#allocation2 + $0x2a0] sm:$0xff]
    %v1171 = vld [vmem:[#allocation2 + $0x2a8] sm:$0xff]
    %v1172 = vld [vmem:[#allocation2 + $0x2b0] sm:$0xff]
    %v1173 = vld [vmem:[#allocation2 + $0x2b8] sm:$0xff]
    %v1174 = vld [vmem:[#allocation2 + $0x2c0] sm:$0xff]
    %v1175 = vld [vmem:[#allocation2 + $0x2c8] sm:$0xff]
    %v1176 = vld [vmem:[#allocation2 + $0x2d0] sm:$0xff]
    %v1177 = vld [vmem:[#allocation2 + $0x2d8] sm:$0xff]
    %v1178 = vld [vmem:[#allocation2 + $0x2e0] sm:$0xff]
    %v1179 = vld [vmem:[#allocation2 + $0x2e8] sm:$0xff]
    %v1180 = vld [vmem:[#allocation2 + $0x2f0] sm:$0xff]
    %v1181 = vld [vmem:[#allocation2 + $0x2f8] sm:$0xff]
    %v1182 = vld [vmem:[#allocation2 + $0x300] sm:$0xff]
    %v1183 = vld [vmem:[#allocation2 + $0x308] sm:$0xff]
    %v1184 = vld [vmem:[#allocation2 + $0x310] sm:$0xff]
    %v1185 = vld [vmem:[#allocation2 + $0x318] sm:$0xff]
    %v1186 = vld [vmem:[#allocation2 + $0x320] sm:$0xff]
    %v1187 = vld [vmem:[#allocation2 + $0x328] sm:$0xff]
    %v1188 = vld [vmem:[#allocation2 + $0x330] sm:$0xff]
    %v1189 = vld [vmem:[#allocation2 + $0x338] sm:$0xff]
    %v1190 = vld [vmem:[#allocation2 + $0x340] sm:$0xff]
    %v1191 = vld [vmem:[#allocation2 + $0x348] sm:$0xff]
    %v1192 = vld [vmem:[#allocation2 + $0x350] sm:$0xff]
    %v1193 = vld [vmem:[#allocation2 + $0x358] sm:$0xff]
    %v1194 = vld [vmem:[#allocation2 + $0x360] sm:$0xff]
    %v1195 = vld [vmem:[#allocation2 + $0x368] sm:$0xff]
    %v1196 = vld [vmem:[#allocation2 + $0x370] sm:$0xff]
    %v1197 = vld [vmem:[#allocation2 + $0x378] sm:$0xff]
    %v1198 = vld [vmem:[#allocation2 + $0x380] sm:$0xff]
    %v1199 = vld [vmem:[#allocation2 + $0x388] sm:$0xff]
    %v1200 = vld [vmem:[#allocation2 + $0x390] sm:$0xff]
    %v1201 = vld [vmem:[#allocation2 + $0x398] sm:$0xff]
    %v1202 = vld [vmem:[#allocation2 + $0x3a0] sm:$0xff]
    %v1203 = vld [vmem:[#allocation2 + $0x3a8] sm:$0xff]
    %v1204 = vld [vmem:[#allocation2 + $0x3b0] sm:$0xff]
    %v1205 = vld [vmem:[#allocation2 + $0x3b8] sm:$0xff]
    %v1206 = vld [vmem:[#allocation2 + $0x3c0] sm:$0xff]
    %v1207 = vld [vmem:[#allocation2 + $0x3c8] sm:$0xff]
    %v1208 = vld [vmem:[#allocation2 + $0x3d0] sm:$0xff]
    %v1209 = vld [vmem:[#allocation2 + $0x3d8] sm:$0xff]
    %v1210 = vld [vmem:[#allocation2 + $0x3e0] sm:$0xff]
    %v1211 = vld [vmem:[#allocation2 + $0x3e8] sm:$0xff]
    %v1212 = vld [vmem:[#allocation2 + $0x3f0] sm:$0xff]
    %v1213 = vld [vmem:[#allocation2 + $0x3f8] sm:$0xff]
    %v1214 = vld [vmem:[#allocation2 + $0x400] sm:$0xff]
    %v1215 = vld [vmem:[#allocation2 + $0x408] sm:$0xff]
    %v1216 = vld [vmem:[#allocation2 + $0x410] sm:$0xff]
    %v1217 = vld [vmem:[#allocation2 + $0x418] sm:$0xff]
    %v1218 = vld [vmem:[#allocation2 + $0x420] sm:$0xff]
    %v1219 = vld [vmem:[#allocation2 + $0x428] sm:$0xff]
    %v1220 = vld [vmem:[#allocation2 + $0x430] sm:$0xff]
    %v1221 = vld [vmem:[#allocation2 + $0x438] sm:$0xff]
    %v1222 = vld [vmem:[#allocation2 + $0x440] sm:$0xff]
    %v1223 = vld [vmem:[#allocation2 + $0x448] sm:$0xff]
    %v1224 = vld [vmem:[#allocation2 + $0x450] sm:$0xff]
    %v1225 = vld [vmem:[#allocation2 + $0x458] sm:$0xff]
    %v1226 = vld [vmem:[#allocation2 + $0x460] sm:$0xff]
    %v1227 = vld [vmem:[#allocation2 + $0x468] sm:$0xff]
    %v1228 = vld [vmem:[#allocation2 + $0x470] sm:$0xff]
    %v1229 = vld [vmem:[#allocation2 + $0x478] sm:$0xff]
    %v1230 = vld [vmem:[#allocation2 + $0x480] sm:$0xff]
    %v1231 = vld [vmem:[#allocation2 + $0x488] sm:$0xff]
    %v1232 = vld [vmem:[#allocation2 + $0x490] sm:$0xff]
    %v1233 = vld [vmem:[#allocation2 + $0x498] sm:$0xff]
    %v1234 = vld [vmem:[#allocation2 + $0x4a0] sm:$0xff]
    %v1235 = vld [vmem:[#allocation2 + $0x4a8] sm:$0xff]
    %v1236 = vld [vmem:[#allocation2 + $0x4b0] sm:$0xff]
    %v1237 = vld [vmem:[#allocation2 + $0x4b8] sm:$0xff]
    %v1238 = vld [vmem:[#allocation2 + $0x4c0] sm:$0xff]
    %v1239 = vld [vmem:[#allocation2 + $0x4c8] sm:$0xff]
    %v1240 = vld [vmem:[#allocation2 + $0x4d0] sm:$0xff]
    %v1241 = vld [vmem:[#allocation2 + $0x4d8] sm:$0xff]
    %v1242 = vld [vmem:[#allocation2 + $0x4e0] sm:$0xff]
    %v1243 = vld [vmem:[#allocation2 + $0x4e8] sm:$0xff]
    %v1244 = vld [vmem:[#allocation2 + $0x4f0] sm:$0xff]
    %v1245 = vld [vmem:[#allocation2 + $0x4f8] sm:$0xff]
    %v1246 = vld [vmem:[#allocation2 + $0x500] sm:$0xff]
    %v1247 = vld [vmem:[#allocation2 + $0x508] sm:$0xff]
    %v1248 = vld [vmem:[#allocation2 + $0x510] sm:$0xff]
    %v1249 = vld [vmem:[#allocation2 + $0x518] sm:$0xff]
    %v1250 = vld [vmem:[#allocation2 + $0x520] sm:$0xff]
    %v1251 = vld [vmem:[#allocation2 + $0x528] sm:$0xff]
    %v1252 = vld [vmem:[#allocation2 + $0x530] sm:$0xff]
    %v1253 = vld [vmem:[#allocation2 + $0x538] sm:$0xff]
    %v1254 = vld [vmem:[#allocation2 + $0x540] sm:$0xff]
    %v1255 = vld [vmem:[#allocation2 + $0x548] sm:$0xff]
    %v1256 = vld [vmem:[#allocation2 + $0x550] sm:$0xff]
    %v1257 = vld [vmem:[#allocation2 + $0x558] sm:$0xff]
    %v1258 = vld [vmem:[#allocation2 + $0x560] sm:$0xff]
    %v1259 = vld [vmem:[#allocation2 + $0x568] sm:$0xff]
    %v1260 = vld [vmem:[#allocation2 + $0x570] sm:$0xff]
    %v1261 = vld [vmem:[#allocation2 + $0x578] sm:$0xff]
    %v1262 = vld [vmem:[#allocation2 + $0x580] sm:$0xff]
    %v1263 = vld [vmem:[#allocation2 + $0x588] sm:$0xff]
    %v1264 = vld [vmem:[#allocation2 + $0x590] sm:$0xff]
    %v1265 = vld [vmem:[#allocation2 + $0x598] sm:$0xff]
    %v1266 = vld [vmem:[#allocation2 + $0x5a0] sm:$0xff]
    %v1267 = vld [vmem:[#allocation2 + $0x5a8] sm:$0xff]
    %v1268 = vld [vmem:[#allocation2 + $0x5b0] sm:$0xff]
    %v1269 = vld [vmem:[#allocation2 + $0x5b8] sm:$0xff]
    %v1270 = vld [vmem:[#allocation2 + $0x5c0] sm:$0xff]
    %v1271 = vld [vmem:[#allocation2 + $0x5c8] sm:$0xff]
    %v1272 = vld [vmem:[#allocation2 + $0x5d0] sm:$0xff]
    %v1273 = vld [vmem:[#allocation2 + $0x5d8] sm:$0xff]
    %v1274 = vld [vmem:[#allocation2 + $0x5e0] sm:$0xff]
    %v1275 = vld [vmem:[#allocation2 + $0x5e8] sm:$0xff]
    %v1276 = vld [vmem:[#allocation2 + $0x5f0] sm:$0xff]
    %v1277 = vld [vmem:[#allocation2 + $0x5f8] sm:$0xff]
    %v1278 = vld [vmem:[#allocation2 + $0x600] sm:$0xff]
    %v1279 = vld [vmem:[#allocation2 + $0x608] sm:$0xff]
    %v1280 = vld [vmem:[#allocation2 + $0x610] sm:$0xff]
    %v1281 = vld [vmem:[#allocation2 + $0x618] sm:$0xff]
    %v1282 = vld [vmem:[#allocation2 + $0x620] sm:$0xff]
    %v1283 = vld [vmem:[#allocation2 + $0x628] sm:$0xff]
    %v1284 = vld [vmem:[#allocation2 + $0x630] sm:$0xff]
    %v1285 = vld [vmem:[#allocation2 + $0x638] sm:$0xff]
    %v1286 = vld [vmem:[#allocation2 + $0x640] sm:$0xff]
    %v1287 = vld [vmem:[#allocation2 + $0x648] sm:$0xff]
    %v1288 = vld [vmem:[#allocation2 + $0x650] sm:$0xff]
    %v1289 = vld [vmem:[#allocation2 + $0x658] sm:$0xff]
    %v1290 = vld [vmem:[#allocation2 + $0x660] sm:$0xff]
    %v1291 = vld [vmem:[#allocation2 + $0x668] sm:$0xff]
    %v1292 = vld [vmem:[#allocation2 + $0x670] sm:$0xff]
    %v1293 = vld [vmem:[#allocation2 + $0x678] sm:$0xff]
    %v1294 = vld [vmem:[#allocation2 + $0x680] sm:$0xff]
    %v1295 = vld [vmem:[#allocation2 + $0x688] sm:$0xff]
    %v1296 = vld [vmem:[#allocation2 + $0x690] sm:$0xff]
    %v1297 = vld [vmem:[#allocation2 + $0x698] sm:$0xff]
    %v1298 = vld [vmem:[#allocation2 + $0x6a0] sm:$0xff]
    %v1299 = vld [vmem:[#allocation2 + $0x6a8] sm:$0xff]
    %v1300 = vld [vmem:[#allocation2 + $0x6b0] sm:$0xff]
    %v1301 = vld [vmem:[#allocation2 + $0x6b8] sm:$0xff]
    %v1302 = vld [vmem:[#allocation2 + $0x6c0] sm:$0xff]
    %v1303 = vld [vmem:[#allocation2 + $0x6c8] sm:$0xff]
    %v1304 = vld [vmem:[#allocation2 + $0x6d0] sm:$0xff]
    %v1305 = vld [vmem:[#allocation2 + $0x6d8] sm:$0xff]
    %v1306 = vld [vmem:[#allocation2 + $0x6e0] sm:$0xff]
    %v1307 = vld [vmem:[#allocation2 + $0x6e8] sm:$0xff]
    %v1308 = vld [vmem:[#allocation2 + $0x6f0] sm:$0xff]
    %v1309 = vld [vmem:[#allocation2 + $0x6f8] sm:$0xff]
    %v1310 = vld [vmem:[#allocation2 + $0x700] sm:$0xff]
    %v1311 = vld [vmem:[#allocation2 + $0x708] sm:$0xff]
    %v1312 = vld [vmem:[#allocation2 + $0x710] sm:$0xff]
    %v1313 = vld [vmem:[#allocation2 + $0x718] sm:$0xff]
    %v1314 = vld [vmem:[#allocation2 + $0x720] sm:$0xff]
    %v1315 = vld [vmem:[#allocation2 + $0x728] sm:$0xff]
    %v1316 = vld [vmem:[#allocation2 + $0x730] sm:$0xff]
    %v1317 = vld [vmem:[#allocation2 + $0x738] sm:$0xff]
    %v1318 = vld [vmem:[#allocation2 + $0x740] sm:$0xff]
    %v1319 = vld [vmem:[#allocation2 + $0x748] sm:$0xff]
    %v1320 = vld [vmem:[#allocation2 + $0x750] sm:$0xff]
    %v1321 = vld [vmem:[#allocation2 + $0x758] sm:$0xff]
    %v1322 = vld [vmem:[#allocation2 + $0x760] sm:$0xff]
    %v1323 = vld [vmem:[#allocation2 + $0x768] sm:$0xff]
    %v1324 = vld [vmem:[#allocation2 + $0x770] sm:$0xff]
    %v1325 = vld [vmem:[#allocation2 + $0x778] sm:$0xff]
    %v1326 = vld [vmem:[#allocation2 + $0x780] sm:$0xff]
    %v1327 = vld [vmem:[#allocation2 + $0x788] sm:$0xff]
    %v1328 = vld [vmem:[#allocation2 + $0x790] sm:$0xff]
    %v1329 = vld [vmem:[#allocation2 + $0x798] sm:$0xff]
    %v1330 = vld [vmem:[#allocation2 + $0x7a0] sm:$0xff]
    %v1331 = vld [vmem:[#allocation2 + $0x7a8] sm:$0xff]
    %v1332 = vld [vmem:[#allocation2 + $0x7b0] sm:$0xff]
    %v1333 = vld [vmem:[#allocation2 + $0x7b8] sm:$0xff]
    %v1334 = vld [vmem:[#allocation2 + $0x7c0] sm:$0xff]
    %v1335 = vld [vmem:[#allocation2 + $0x7c8] sm:$0xff]
    %v1336 = vld [vmem:[#allocation2 + $0x7d0] sm:$0xff]
    %v1337 = vld [vmem:[#allocation2 + $0x7d8] sm:$0xff]
    %v1338 = vld [vmem:[#allocation2 + $0x7e0] sm:$0xff]
    %v1339 = vld [vmem:[#allocation2 + $0x7e8] sm:$0xff]
    %v1340 = vld [vmem:[#allocation2 + $0x7f0] sm:$0xff]
    %v1341 = vld [vmem:[#allocation2 + $0x7f8] sm:$0xff]
    %v1342 = vld [vmem:[#allocation2 + $0x800] sm:$0xff]
    %v1343 = vld [vmem:[#allocation2 + $0x808] sm:$0xff]
    %v1344 = vld [vmem:[#allocation2 + $0x810] sm:$0xff]
    %v1345 = vld [vmem:[#allocation2 + $0x818] sm:$0xff]
    %v1346 = vld [vmem:[#allocation2 + $0x820] sm:$0xff]
    %v1347 = vld [vmem:[#allocation2 + $0x828] sm:$0xff]
    %v1348 = vld [vmem:[#allocation2 + $0x830] sm:$0xff]
    %v1349 = vld [vmem:[#allocation2 + $0x838] sm:$0xff]
    %v1350 = vld [vmem:[#allocation2 + $0x840] sm:$0xff]
    %v1351 = vld [vmem:[#allocation2 + $0x848] sm:$0xff]
    %v1352 = vld [vmem:[#allocation2 + $0x850] sm:$0xff]
    %v1353 = vld [vmem:[#allocation2 + $0x858] sm:$0xff]
    %v1354 = vld [vmem:[#allocation2 + $0x860] sm:$0xff]
    %v1355 = vld [vmem:[#allocation2 + $0x868] sm:$0xff]
    %v1356 = vld [vmem:[#allocation2 + $0x870] sm:$0xff]
    %v1357 = vld [vmem:[#allocation2 + $0x878] sm:$0xff]
    %v1358 = vld [vmem:[#allocation2 + $0x880] sm:$0xff]
    %v1359 = vld [vmem:[#allocation2 + $0x888] sm:$0xff]
    %v1360 = vld [vmem:[#allocation2 + $0x890] sm:$0xff]
    %v1361 = vld [vmem:[#allocation2 + $0x898] sm:$0xff]
    %v1362 = vld [vmem:[#allocation2 + $0x8a0] sm:$0xff]
    %v1363 = vld [vmem:[#allocation2 + $0x8a8] sm:$0xff]
    %v1364 = vld [vmem:[#allocation2 + $0x8b0] sm:$0xff]
    %v1365 = vld [vmem:[#allocation2 + $0x8b8] sm:$0xff]
    %v1366 = vld [vmem:[#allocation2 + $0x8c0] sm:$0xff]
    %v1367 = vld [vmem:[#allocation2 + $0x8c8] sm:$0xff]
    %v1368 = vld [vmem:[#allocation2 + $0x8d0] sm:$0xff]
    %v1369 = vld [vmem:[#allocation2 + $0x8d8] sm:$0xff]
    %v1370 = vld [vmem:[#allocation2 + $0x8e0] sm:$0xff]
    %v1371 = vld [vmem:[#allocation2 + $0x8e8] sm:$0xff]
    %v1372 = vld [vmem:[#allocation2 + $0x8f0] sm:$0xff]
    %v1373 = vld [vmem:[#allocation2 + $0x8f8] sm:$0xff]
    %v1374 = vld [vmem:[#allocation2 + $0x900] sm:$0xff]
    %v1375 = vld [vmem:[#allocation2 + $0x908] sm:$0xff]
    %v1376 = vld [vmem:[#allocation2 + $0x910] sm:$0xff]
    %v1377 = vld [vmem:[#allocation2 + $0x918] sm:$0xff]
    %v1378 = vld [vmem:[#allocation2 + $0x920] sm:$0xff]
    %v1379 = vld [vmem:[#allocation2 + $0x928] sm:$0xff]
    %v1380 = vld [vmem:[#allocation2 + $0x930] sm:$0xff]
    %v1381 = vld [vmem:[#allocation2 + $0x938] sm:$0xff]
    %v1382 = vld [vmem:[#allocation2 + $0x940] sm:$0xff]
    %v1383 = vld [vmem:[#allocation2 + $0x948] sm:$0xff]
    %v1384 = vld [vmem:[#allocation2 + $0x950] sm:$0xff]
    %v1385 = vld [vmem:[#allocation2 + $0x958] sm:$0xff]
    %v1386 = vld [vmem:[#allocation2 + $0x960] sm:$0xff]
    %v1387 = vld [vmem:[#allocation2 + $0x968] sm:$0xff]
    %v1388 = vld [vmem:[#allocation2 + $0x970] sm:$0xff]
    %v1389 = vld [vmem:[#allocation2 + $0x978] sm:$0xff]
    %v1390 = vld [vmem:[#allocation2 + $0x980] sm:$0xff]
    %v1391 = vld [vmem:[#allocation2 + $0x988] sm:$0xff]
    %v1392 = vld [vmem:[#allocation2 + $0x990] sm:$0xff]
    %v1393 = vld [vmem:[#allocation2 + $0x998] sm:$0xff]
    %v1394 = vld [vmem:[#allocation2 + $0x9a0] sm:$0xff]
    %v1395 = vld [vmem:[#allocation2 + $0x9a8] sm:$0xff]
    %v1396 = vld [vmem:[#allocation2 + $0x9b0] sm:$0xff]
    %v1397 = vld [vmem:[#allocation2 + $0x9b8] sm:$0xff]
    %v1398 = vld [vmem:[#allocation2 + $0x9c0] sm:$0xff]
    %v1399 = vld [vmem:[#allocation2 + $0x9c8] sm:$0xff]
    %v1400 = vld [vmem:[#allocation2 + $0x9d0] sm:$0xff]
    %v1401 = vld [vmem:[#allocation2 + $0x9d8] sm:$0xff]
    %v1402 = vld [vmem:[#allocation2 + $0x9e0] sm:$0xff]
    %v1403 = vld [vmem:[#allocation2 + $0x9e8] sm:$0xff]
    %v1404 = vld [vmem:[#allocation2 + $0x9f0] sm:$0xff]
    %v1405 = vld [vmem:[#allocation2 + $0x9f8] sm:$0xff]
    %v1406 = vld [vmem:[#allocation2 + $0xa00] sm:$0xff]
    %v1407 = vld [vmem:[#allocation2 + $0xa08] sm:$0xff]
    %v1408 = vld [vmem:[#allocation2 + $0xa10] sm:$0xff]
    %v1409 = vld [vmem:[#allocation2 + $0xa18] sm:$0xff]
    %v1410 = vld [vmem:[#allocation2 + $0xa20] sm:$0xff]
    %v1411 = vld [vmem:[#allocation2 + $0xa28] sm:$0xff]
    %v1412 = vld [vmem:[#allocation2 + $0xa30] sm:$0xff]
    %v1413 = vld [vmem:[#allocation2 + $0xa38] sm:$0xff]
    %v1414 = vld [vmem:[#allocation2 + $0xa40] sm:$0xff]
    %v1415 = vld [vmem:[#allocation2 + $0xa48] sm:$0xff]
    %v1416 = vld [vmem:[#allocation2 + $0xa50] sm:$0xff]
    %v1417 = vld [vmem:[#allocation2 + $0xa58] sm:$0xff]
    %v1418 = vld [vmem:[#allocation2 + $0xa60] sm:$0xff]
    %v1419 = vld [vmem:[#allocation2 + $0xa68] sm:$0xff]
    %v1420 = vld [vmem:[#allocation2 + $0xa70] sm:$0xff]
    %v1421 = vld [vmem:[#allocation2 + $0xa78] sm:$0xff]
    %v1422 = vld [vmem:[#allocation2 + $0xa80] sm:$0xff]
    %v1423 = vld [vmem:[#allocation2 + $0xa88] sm:$0xff]
    %v1424 = vld [vmem:[#allocation2 + $0xa90] sm:$0xff]
    %v1425 = vld [vmem:[#allocation2 + $0xa98] sm:$0xff]
    %v1426 = vld [vmem:[#allocation2 + $0xaa0] sm:$0xff]
    %v1427 = vld [vmem:[#allocation2 + $0xaa8] sm:$0xff]
    %v1428 = vld [vmem:[#allocation2 + $0xab0] sm:$0xff]
    %v1429 = vld [vmem:[#allocation2 + $0xab8] sm:$0xff]
    %v1430 = vld [vmem:[#allocation2 + $0xac0] sm:$0xff]
    %v1431 = vld [vmem:[#allocation2 + $0xac8] sm:$0xff]
    %v1432 = vld [vmem:[#allocation2 + $0xad0] sm:$0xff]
    %v1433 = vld [vmem:[#allocation2 + $0xad8] sm:$0x1]
    %v1434 = vsel %vm738, 1, 0
    %v1435 = vsel %vm739, 1, 0
    %v1436 = vsel %vm740, 1, 0
    %v1437 = vsel %vm741, 1, 0
    %v1438 = vsel %vm742, 1, 0
    %v1439 = vsel %vm743, 1, 0
    %v1440 = vsel %vm744, 1, 0
    %v1441 = vsel %vm745, 1, 0
    %v1442 = vsel %vm746, 1, 0
    %v1443 = vsel %vm747, 1, 0
    %v1444 = vsel %vm748, 1, 0
    %v1445 = vsel %vm749, 1, 0
    %v1446 = vsel %vm750, 1, 0
    %v1447 = vsel %vm751, 1, 0
    %v1448 = vsel %vm752, 1, 0
    %v1449 = vsel %vm753, 1, 0
    %v1450 = vsel %vm754, 1, 0
    %v1451 = vsel %vm755, 1, 0
    %v1452 = vsel %vm756, 1, 0
    %v1453 = vsel %vm757, 1, 0
    %v1454 = vsel %vm758, 1, 0
    %v1455 = vsel %vm759, 1, 0
    %v1456 = vsel %vm760, 1, 0
    %v1457 = vsel %vm761, 1, 0
    %v1458 = vsel %vm762, 1, 0
    %v1459 = vsel %vm763, 1, 0
    %v1460 = vsel %vm764, 1, 0
    %v1461 = vsel %vm765, 1, 0
    %v1462 = vsel %vm766, 1, 0
    %v1463 = vsel %vm767, 1, 0
    %v1464 = vsel %vm768, 1, 0
    %v1465 = vsel %vm769, 1, 0
    %v1466 = vsel %vm770, 1, 0
    %v1467 = vsel %vm771, 1, 0
    %v1468 = vsel %vm772, 1, 0
    %v1469 = vsel %vm773, 1, 0
    %v1470 = vsel %vm774, 1, 0
    %v1471 = vsel %vm775, 1, 0
    %v1472 = vsel %vm776, 1, 0
    %v1473 = vsel %vm777, 1, 0
    %v1474 = vsel %vm778, 1, 0
    %v1475 = vsel %vm779, 1, 0
    %v1476 = vsel %vm780, 1, 0
    %v1477 = vsel %vm781, 1, 0
    %v1478 = vsel %vm782, 1, 0
    %v1479 = vsel %vm783, 1, 0
    %v1480 = vsel %vm784, 1, 0
    %v1481 = vsel %vm785, 1, 0
    %v1482 = vsel %vm786, 1, 0
    %v1483 = vsel %vm787, 1, 0
    %v1484 = vsel %vm788, 1, 0
    %v1485 = vsel %vm789, 1, 0
    %v1486 = vsel %vm790, 1, 0
    %v1487 = vsel %vm791, 1, 0
    %v1488 = vsel %vm792, 1, 0
    %v1489 = vsel %vm793, 1, 0
    %v1490 = vsel %vm794, 1, 0
    %v1491 = vsel %vm795, 1, 0
    %v1492 = vsel %vm796, 1, 0
    %v1493 = vsel %vm797, 1, 0
    %v1494 = vsel %vm798, 1, 0
    %v1495 = vsel %vm799, 1, 0
    %v1496 = vsel %vm800, 1, 0
    %v1497 = vsel %vm801, 1, 0
    %v1498 = vsel %vm802, 1, 0
    %v1499 = vsel %vm803, 1, 0
    %v1500 = vsel %vm804, 1, 0
    %v1501 = vsel %vm805, 1, 0
    %v1502 = vsel %vm806, 1, 0
    %v1503 = vsel %vm807, 1, 0
    %v1504 = vsel %vm808, 1, 0
    %v1505 = vsel %vm809, 1, 0
    %v1506 = vsel %vm810, 1, 0
    %v1507 = vsel %vm811, 1, 0
    %v1508 = vsel %vm812, 1, 0
    %v1509 = vsel %vm813, 1, 0
    %v1510 = vsel %vm814, 1, 0
    %v1511 = vsel %vm815, 1, 0
    %v1512 = vsel %vm816, 1, 0
    %v1513 = vsel %vm817, 1, 0
    %v1514 = vsel %vm818, 1, 0
    %v1515 = vsel %vm819, 1, 0
    %v1516 = vsel %vm820, 1, 0
    %v1517 = vsel %vm821, 1, 0
    %v1518 = vsel %vm822, 1, 0
    %v1519 = vsel %vm823, 1, 0
    %v1520 = vsel %vm824, 1, 0
    %v1521 = vsel %vm825, 1, 0
    %v1522 = vsel %vm826, 1, 0
    %v1523 = vsel %vm827, 1, 0
    %v1524 = vsel %vm828, 1, 0
    %v1525 = vsel %vm829, 1, 0
    %v1526 = vsel %vm830, 1, 0
    %v1527 = vsel %vm831, 1, 0
    %v1528 = vsel %vm832, 1, 0
    %v1529 = vsel %vm833, 1, 0
    %v1530 = vsel %vm834, 1, 0
    %v1531 = vsel %vm835, 1, 0
    %v1532 = vsel %vm836, 1, 0
    %v1533 = vsel %vm837, 1, 0
    %v1534 = vsel %vm838, 1, 0
    %v1535 = vsel %vm839, 1, 0
    %v1536 = vsel %vm840, 1, 0
    %v1537 = vsel %vm841, 1, 0
    %v1538 = vsel %vm842, 1, 0
    %v1539 = vsel %vm843, 1, 0
    %v1540 = vsel %vm844, 1, 0
    %v1541 = vsel %vm845, 1, 0
    %v1542 = vsel %vm846, 1, 0
    %v1543 = vsel %vm847, 1, 0
    %v1544 = vsel %vm848, 1, 0
    %v1545 = vsel %vm849, 1, 0
    %v1546 = vsel %vm850, 1, 0
    %v1547 = vsel %vm851, 1, 0
    %v1548 = vsel %vm852, 1, 0
    %v1549 = vsel %vm853, 1, 0
    %v1550 = vsel %vm854, 1, 0
    %v1551 = vsel %vm855, 1, 0
    %v1552 = vsel %vm856, 1, 0
    %v1553 = vsel %vm857, 1, 0
    %v1554 = vsel %vm858, 1, 0
    %v1555 = vsel %vm859, 1, 0
    %v1556 = vsel %vm860, 1, 0
    %v1557 = vsel %vm861, 1, 0
    %v1558 = vsel %vm862, 1, 0
    %v1559 = vsel %vm863, 1, 0
    %v1560 = vsel %vm864, 1, 0
    %v1561 = vsel %vm865, 1, 0
    %v1562 = vsel %vm866, 1, 0
    %v1563 = vsel %vm867, 1, 0
    %v1564 = vsel %vm868, 1, 0
    %v1565 = vsel %vm869, 1, 0
    %v1566 = vsel %vm870, 1, 0
    %v1567 = vsel %vm871, 1, 0
    %v1568 = vsel %vm872, 1, 0
    %v1569 = vsel %vm873, 1, 0
    %v1570 = vsel %vm874, 1, 0
    %v1571 = vsel %vm875, 1, 0
    %v1572 = vsel %vm876, 1, 0
    %v1573 = vsel %vm877, 1, 0
    %v1574 = vsel %vm878, 1, 0
    %v1575 = vsel %vm879, 1, 0
    %v1576 = vsel %vm880, 1, 0
    %v1577 = vsel %vm881, 1, 0
    %v1578 = vsel %vm882, 1, 0
    %v1579 = vsel %vm883, 1, 0
    %v1580 = vsel %vm884, 1, 0
    %v1581 = vsel %vm885, 1, 0
    %v1582 = vsel %vm886, 1, 0
    %v1583 = vsel %vm887, 1, 0
    %v1584 = vsel %vm888, 1, 0
    %v1585 = vsel %vm889, 1, 0
    %v1586 = vsel %vm890, 1, 0
    %v1587 = vsel %vm891, 1, 0
    %v1588 = vsel %vm892, 1, 0
    %v1589 = vsel %vm893, 1, 0
    %v1590 = vsel %vm894, 1, 0
    %v1591 = vsel %vm895, 1, 0
    %v1592 = vsel %vm896, 1, 0
    %v1593 = vsel %vm897, 1, 0
    %v1594 = vsel %vm898, 1, 0
    %v1595 = vsel %vm899, 1, 0
    %v1596 = vsel %vm900, 1, 0
    %v1597 = vsel %vm901, 1, 0
    %v1598 = vsel %vm902, 1, 0
    %v1599 = vsel %vm903, 1, 0
    %v1600 = vsel %vm904, 1, 0
    %v1601 = vsel %vm905, 1, 0
    %v1602 = vsel %vm906, 1, 0
    %v1603 = vsel %vm907, 1, 0
    %v1604 = vsel %vm908, 1, 0
    %v1605 = vsel %vm909, 1, 0
    %v1606 = vsel %vm910, 1, 0
    %v1607 = vsel %vm911, 1, 0
    %v1608 = vsel %vm912, 1, 0
    %v1609 = vsel %vm913, 1, 0
    %v1610 = vsel %vm914, 1, 0
    %v1611 = vsel %vm915, 1, 0
    %v1612 = vsel %vm916, 1, 0
    %v1613 = vsel %vm917, 1, 0
    %v1614 = vsel %vm918, 1, 0
    %v1615 = vsel %vm919, 1, 0
    %v1616 = vsel %vm920, 1, 0
    %v1617 = vsel %vm921, 1, 0
    %v1618 = vsel %vm922, 1, 0
    %v1619 = vsel %vm923, 1, 0
    %v1620 = vsel %vm924, 1, 0
    %v1621 = vsel %vm925, 1, 0
    %v1622 = vsel %vm926, 1, 0
    %v1623 = vsel %vm927, 1, 0
    %v1624 = vsel %vm928, 1, 0
    %v1625 = vsel %vm929, 1, 0
    %v1626 = vsel %vm930, 1, 0
    %v1627 = vsel %vm931, 1, 0
    %v1628 = vsel %vm932, 1, 0
    %v1629 = vsel %vm933, 1, 0
    %v1630 = vsel %vm934, 1, 0
    %v1631 = vsel %vm935, 1, 0
    %v1632 = vsel %vm936, 1, 0
    %v1633 = vsel %vm937, 1, 0
    %v1634 = vsel %vm938, 1, 0
    %v1635 = vsel %vm939, 1, 0
    %v1636 = vsel %vm940, 1, 0
    %v1637 = vsel %vm941, 1, 0
    %v1638 = vsel %vm942, 1, 0
    %v1639 = vsel %vm943, 1, 0
    %v1640 = vsel %vm944, 1, 0
    %v1641 = vsel %vm945, 1, 0
    %v1642 = vsel %vm946, 1, 0
    %v1643 = vsel %vm947, 1, 0
    %v1644 = vsel %vm948, 1, 0
    %v1645 = vsel %vm949, 1, 0
    %v1646 = vsel %vm950, 1, 0
    %v1647 = vsel %vm951, 1, 0
    %v1648 = vsel %vm952, 1, 0
    %v1649 = vsel %vm953, 1, 0
    %v1650 = vsel %vm954, 1, 0
    %v1651 = vsel %vm955, 1, 0
    %v1652 = vsel %vm956, 1, 0
    %v1653 = vsel %vm957, 1, 0
    %v1654 = vsel %vm958, 1, 0
    %v1655 = vsel %vm959, 1, 0
    %v1656 = vsel %vm960, 1, 0
    %v1657 = vsel %vm961, 1, 0
    %v1658 = vsel %vm962, 1, 0
    %v1659 = vsel %vm963, 1, 0
    %v1660 = vsel %vm964, 1, 0
    %v1661 = vsel %vm965, 1, 0
    %v1662 = vsel %vm966, 1, 0
    %v1663 = vsel %vm967, 1, 0
    %v1664 = vsel %vm968, 1, 0
    %v1665 = vsel %vm969, 1, 0
    %v1666 = vsel %vm970, 1, 0
    %v1667 = vsel %vm971, 1, 0
    %v1668 = vsel %vm972, 1, 0
    %v1669 = vsel %vm973, 1, 0
    %v1670 = vsel %vm974, 1, 0
    %v1671 = vsel %vm975, 1, 0
    %v1672 = vsel %vm976, 1, 0
    %v1673 = vsel %vm977, 1, 0
    %v1674 = vsel %vm978, 1, 0
    %v1675 = vsel %vm979, 1, 0
    %v1676 = vsel %vm980, 1, 0
    %v1677 = vsel %vm981, 1, 0
    %v1678 = vsel %vm982, 1, 0
    %v1679 = vsel %vm983, 1, 0
    %v1680 = vsel %vm984, 1, 0
    %v1681 = vsel %vm985, 1, 0
    %v1682 = vsel %vm986, 1, 0
    %v1683 = vsel %vm987, 1, 0
    %v1684 = vsel %vm988, 1, 0
    %v1685 = vsel %vm989, 1, 0
    %v1686 = vsel %vm990, 1, 0
    %v1687 = vsel %vm991, 1, 0
    %v1688 = vsel %vm992, 1, 0
    %v1689 = vsel %vm993, 1, 0
    %v1690 = vsel %vm994, 1, 0
    %v1691 = vsel %vm995, 1, 0
    %v1692 = vsel %vm996, 1, 0
    %v1693 = vsel %vm997, 1, 0
    %v1694 = vsel %vm998, 1, 0
    %v1695 = vsel %vm999, 1, 0
    %v1696 = vsel %vm1000, 1, 0
    %v1697 = vsel %vm1001, 1, 0
    %v1698 = vsel %vm1002, 1, 0
    %v1699 = vsel %vm1003, 1, 0
    %v1700 = vsel %vm1004, 1, 0
    %v1701 = vsel %vm1005, 1, 0
    %v1702 = vsel %vm1006, 1, 0
    %v1703 = vsel %vm1007, 1, 0
    %v1704 = vsel %vm1008, 1, 0
    %v1705 = vsel %vm1009, 1, 0
    %v1706 = vsel %vm1010, 1, 0
    %v1707 = vsel %vm1011, 1, 0
    %v1708 = vsel %vm1012, 1, 0
    %v1709 = vsel %vm1013, 1, 0
    %v1710 = vsel %vm1014, 1, 0
    %v1711 = vsel %vm1015, 1, 0
    %v1712 = vsel %vm1016, 1, 0
    %v1713 = vsel %vm1017, 1, 0
    %v1714 = vsel %vm1018, 1, 0
    %v1715 = vsel %vm1019, 1, 0
    %v1716 = vsel %vm1020, 1, 0
    %v1717 = vsel %vm1021, 1, 0
    %v1718 = vsel %vm1022, 1, 0
    %v1719 = vsel %vm1023, 1, 0
    %v1720 = vsel %vm1024, 1, 0
    %v1721 = vsel %vm1025, 1, 0
    %v1722 = vsel %vm1026, 1, 0
    %v1723 = vsel %vm1027, 1, 0
    %v1724 = vsel %vm1028, 1, 0
    %v1725 = vsel %vm1029, 1, 0
    %v1726 = vsel %vm1030, 1, 0
    %v1727 = vsel %vm1031, 1, 0
    %v1728 = vsel %vm1032, 1, 0
    %v1729 = vsel %vm1033, 1, 0
    %v1730 = vsel %vm1034, 1, 0
    %v1731 = vsel %vm1035, 1, 0
    %v1732 = vsel %vm1036, 1, 0
    %v1733 = vsel %vm1037, 1, 0
    %v1734 = vsel %vm1038, 1, 0
    %v1735 = vsel %vm1039, 1, 0
    %v1736 = vsel %vm1040, 1, 0
    %v1737 = vsel %vm1041, 1, 0
    %v1738 = vsel %vm1042, 1, 0
    %v1739 = vsel %vm1043, 1, 0
    %v1740 = vsel %vm1044, 1, 0
    %v1741 = vsel %vm1045, 1, 0
    %v1742 = vsel %vm1046, 1, 0
    %v1743 = vsel %vm1047, 1, 0
    %v1744 = vsel %vm1048, 1, 0
    %v1745 = vsel %vm1049, 1, 0
    %v1746 = vsel %vm1050, 1, 0
    %v1747 = vsel %vm1051, 1, 0
    %v1748 = vsel %vm1052, 1, 0
    %v1749 = vsel %vm1053, 1, 0
    %v1750 = vsel %vm1054, 1, 0
    %v1751 = vsel %vm1055, 1, 0
    %v1752 = vsel %vm1056, 1, 0
    %v1753 = vsel %vm1057, 1, 0
    %v1754 = vsel %vm1058, 1, 0
    %v1755 = vsel %vm1059, 1, 0
    %v1756 = vsel %vm1060, 1, 0
    %v1757 = vsel %vm1061, 1, 0
    %v1758 = vsel %vm1062, 1, 0
    %v1759 = vsel %vm1063, 1, 0
    %v1760 = vsel %vm1064, 1, 0
    %v1761 = vsel %vm1065, 1, 0
    %v1762 = vsel %vm1066, 1, 0
    %v1763 = vsel %vm1067, 1, 0
    %v1764 = vsel %vm1068, 1, 0
    %v1765 = vsel %vm1069, 1, 0
    %v1766 = vsel %vm1070, 1, 0
    %v1767 = vsel %vm1071, 1, 0
    %v1768 = vsel %vm1072, 1, 0
    %v1769 = vsel %vm1073, 1, 0
    %v1770 = vsel %vm1074, 1, 0
    %v1771 = vsel %vm1075, 1, 0
    %v1772 = vsel %vm1076, 1, 0
    %v1773 = vsel %vm1077, 1, 0
    %v1774 = vsel %vm1078, 1, 0
    %v1775 = vsel %vm1079, 1, 0
    %v1776 = vsel %vm1080, 1, 0
    %v1777 = vsel %vm1081, 1, 0
    %v1778 = vsel %vm1082, 1, 0
    %v1779 = vsel %vm1083, 1, 0
    %v1780 = vsel %vm1084, 1, 0
    %v1781 = vsel %vm1085, 1, 0
    %vm1782 = vcmp.eq.s32.totalorder %v1434, 1
    %vm1783 = vcmp.eq.s32.totalorder %v1435, 1
    %vm1784 = vcmp.eq.s32.totalorder %v1436, 1
    %vm1785 = vcmp.eq.s32.totalorder %v1437, 1
    %vm1786 = vcmp.eq.s32.totalorder %v1438, 1
    %vm1787 = vcmp.eq.s32.totalorder %v1439, 1
    %vm1788 = vcmp.eq.s32.totalorder %v1440, 1
    %vm1789 = vcmp.eq.s32.totalorder %v1441, 1
    %vm1790 = vcmp.eq.s32.totalorder %v1442, 1
    %vm1791 = vcmp.eq.s32.totalorder %v1443, 1
    %vm1792 = vcmp.eq.s32.totalorder %v1444, 1
    %vm1793 = vcmp.eq.s32.totalorder %v1445, 1
    %vm1794 = vcmp.eq.s32.totalorder %v1446, 1
    %vm1795 = vcmp.eq.s32.totalorder %v1447, 1
    %vm1796 = vcmp.eq.s32.totalorder %v1448, 1
    %vm1797 = vcmp.eq.s32.totalorder %v1449, 1
    %vm1798 = vcmp.eq.s32.totalorder %v1450, 1
    %vm1799 = vcmp.eq.s32.totalorder %v1451, 1
    %vm1800 = vcmp.eq.s32.totalorder %v1452, 1
    %vm1801 = vcmp.eq.s32.totalorder %v1453, 1
    %vm1802 = vcmp.eq.s32.totalorder %v1454, 1
    %vm1803 = vcmp.eq.s32.totalorder %v1455, 1
    %vm1804 = vcmp.eq.s32.totalorder %v1456, 1
    %vm1805 = vcmp.eq.s32.totalorder %v1457, 1
    %vm1806 = vcmp.eq.s32.totalorder %v1458, 1
    %vm1807 = vcmp.eq.s32.totalorder %v1459, 1
    %vm1808 = vcmp.eq.s32.totalorder %v1460, 1
    %vm1809 = vcmp.eq.s32.totalorder %v1461, 1
    %vm1810 = vcmp.eq.s32.totalorder %v1462, 1
    %vm1811 = vcmp.eq.s32.totalorder %v1463, 1
    %vm1812 = vcmp.eq.s32.totalorder %v1464, 1
    %vm1813 = vcmp.eq.s32.totalorder %v1465, 1
    %vm1814 = vcmp.eq.s32.totalorder %v1466, 1
    %vm1815 = vcmp.eq.s32.totalorder %v1467, 1
    %vm1816 = vcmp.eq.s32.totalorder %v1468, 1
    %vm1817 = vcmp.eq.s32.totalorder %v1469, 1
    %vm1818 = vcmp.eq.s32.totalorder %v1470, 1
    %vm1819 = vcmp.eq.s32.totalorder %v1471, 1
    %vm1820 = vcmp.eq.s32.totalorder %v1472, 1
    %vm1821 = vcmp.eq.s32.totalorder %v1473, 1
    %vm1822 = vcmp.eq.s32.totalorder %v1474, 1
    %vm1823 = vcmp.eq.s32.totalorder %v1475, 1
    %vm1824 = vcmp.eq.s32.totalorder %v1476, 1
    %vm1825 = vcmp.eq.s32.totalorder %v1477, 1
    %vm1826 = vcmp.eq.s32.totalorder %v1478, 1
    %vm1827 = vcmp.eq.s32.totalorder %v1479, 1
    %vm1828 = vcmp.eq.s32.totalorder %v1480, 1
    %vm1829 = vcmp.eq.s32.totalorder %v1481, 1
    %vm1830 = vcmp.eq.s32.totalorder %v1482, 1
    %vm1831 = vcmp.eq.s32.totalorder %v1483, 1
    %vm1832 = vcmp.eq.s32.totalorder %v1484, 1
    %vm1833 = vcmp.eq.s32.totalorder %v1485, 1
    %vm1834 = vcmp.eq.s32.totalorder %v1486, 1
    %vm1835 = vcmp.eq.s32.totalorder %v1487, 1
    %vm1836 = vcmp.eq.s32.totalorder %v1488, 1
    %vm1837 = vcmp.eq.s32.totalorder %v1489, 1
    %vm1838 = vcmp.eq.s32.totalorder %v1490, 1
    %vm1839 = vcmp.eq.s32.totalorder %v1491, 1
    %vm1840 = vcmp.eq.s32.totalorder %v1492, 1
    %vm1841 = vcmp.eq.s32.totalorder %v1493, 1
    %vm1842 = vcmp.eq.s32.totalorder %v1494, 1
    %vm1843 = vcmp.eq.s32.totalorder %v1495, 1
    %vm1844 = vcmp.eq.s32.totalorder %v1496, 1
    %vm1845 = vcmp.eq.s32.totalorder %v1497, 1
    %vm1846 = vcmp.eq.s32.totalorder %v1498, 1
    %vm1847 = vcmp.eq.s32.totalorder %v1499, 1
    %vm1848 = vcmp.eq.s32.totalorder %v1500, 1
    %vm1849 = vcmp.eq.s32.totalorder %v1501, 1
    %vm1850 = vcmp.eq.s32.totalorder %v1502, 1
    %vm1851 = vcmp.eq.s32.totalorder %v1503, 1
    %vm1852 = vcmp.eq.s32.totalorder %v1504, 1
    %vm1853 = vcmp.eq.s32.totalorder %v1505, 1
    %vm1854 = vcmp.eq.s32.totalorder %v1506, 1
    %vm1855 = vcmp.eq.s32.totalorder %v1507, 1
    %vm1856 = vcmp.eq.s32.totalorder %v1508, 1
    %vm1857 = vcmp.eq.s32.totalorder %v1509, 1
    %vm1858 = vcmp.eq.s32.totalorder %v1510, 1
    %vm1859 = vcmp.eq.s32.totalorder %v1511, 1
    %vm1860 = vcmp.eq.s32.totalorder %v1512, 1
    %vm1861 = vcmp.eq.s32.totalorder %v1513, 1
    %vm1862 = vcmp.eq.s32.totalorder %v1514, 1
    %vm1863 = vcmp.eq.s32.totalorder %v1515, 1
    %vm1864 = vcmp.eq.s32.totalorder %v1516, 1
    %vm1865 = vcmp.eq.s32.totalorder %v1517, 1
    %vm1866 = vcmp.eq.s32.totalorder %v1518, 1
    %vm1867 = vcmp.eq.s32.totalorder %v1519, 1
    %vm1868 = vcmp.eq.s32.totalorder %v1520, 1
    %vm1869 = vcmp.eq.s32.totalorder %v1521, 1
    %vm1870 = vcmp.eq.s32.totalorder %v1522, 1
    %vm1871 = vcmp.eq.s32.totalorder %v1523, 1
    %vm1872 = vcmp.eq.s32.totalorder %v1524, 1
    %vm1873 = vcmp.eq.s32.totalorder %v1525, 1
    %vm1874 = vcmp.eq.s32.totalorder %v1526, 1
    %vm1875 = vcmp.eq.s32.totalorder %v1527, 1
    %vm1876 = vcmp.eq.s32.totalorder %v1528, 1
    %vm1877 = vcmp.eq.s32.totalorder %v1529, 1
    %vm1878 = vcmp.eq.s32.totalorder %v1530, 1
    %vm1879 = vcmp.eq.s32.totalorder %v1531, 1
    %vm1880 = vcmp.eq.s32.totalorder %v1532, 1
    %vm1881 = vcmp.eq.s32.totalorder %v1533, 1
    %vm1882 = vcmp.eq.s32.totalorder %v1534, 1
    %vm1883 = vcmp.eq.s32.totalorder %v1535, 1
    %vm1884 = vcmp.eq.s32.totalorder %v1536, 1
    %vm1885 = vcmp.eq.s32.totalorder %v1537, 1
    %vm1886 = vcmp.eq.s32.totalorder %v1538, 1
    %vm1887 = vcmp.eq.s32.totalorder %v1539, 1
    %vm1888 = vcmp.eq.s32.totalorder %v1540, 1
    %vm1889 = vcmp.eq.s32.totalorder %v1541, 1
    %vm1890 = vcmp.eq.s32.totalorder %v1542, 1
    %vm1891 = vcmp.eq.s32.totalorder %v1543, 1
    %vm1892 = vcmp.eq.s32.totalorder %v1544, 1
    %vm1893 = vcmp.eq.s32.totalorder %v1545, 1
    %vm1894 = vcmp.eq.s32.totalorder %v1546, 1
    %vm1895 = vcmp.eq.s32.totalorder %v1547, 1
    %vm1896 = vcmp.eq.s32.totalorder %v1548, 1
    %vm1897 = vcmp.eq.s32.totalorder %v1549, 1
    %vm1898 = vcmp.eq.s32.totalorder %v1550, 1
    %vm1899 = vcmp.eq.s32.totalorder %v1551, 1
    %vm1900 = vcmp.eq.s32.totalorder %v1552, 1
    %vm1901 = vcmp.eq.s32.totalorder %v1553, 1
    %vm1902 = vcmp.eq.s32.totalorder %v1554, 1
    %vm1903 = vcmp.eq.s32.totalorder %v1555, 1
    %vm1904 = vcmp.eq.s32.totalorder %v1556, 1
    %vm1905 = vcmp.eq.s32.totalorder %v1557, 1
    %vm1906 = vcmp.eq.s32.totalorder %v1558, 1
    %vm1907 = vcmp.eq.s32.totalorder %v1559, 1
    %vm1908 = vcmp.eq.s32.totalorder %v1560, 1
    %vm1909 = vcmp.eq.s32.totalorder %v1561, 1
    %vm1910 = vcmp.eq.s32.totalorder %v1562, 1
    %vm1911 = vcmp.eq.s32.totalorder %v1563, 1
    %vm1912 = vcmp.eq.s32.totalorder %v1564, 1
    %vm1913 = vcmp.eq.s32.totalorder %v1565, 1
    %vm1914 = vcmp.eq.s32.totalorder %v1566, 1
    %vm1915 = vcmp.eq.s32.totalorder %v1567, 1
    %vm1916 = vcmp.eq.s32.totalorder %v1568, 1
    %vm1917 = vcmp.eq.s32.totalorder %v1569, 1
    %vm1918 = vcmp.eq.s32.totalorder %v1570, 1
    %vm1919 = vcmp.eq.s32.totalorder %v1571, 1
    %vm1920 = vcmp.eq.s32.totalorder %v1572, 1
    %vm1921 = vcmp.eq.s32.totalorder %v1573, 1
    %vm1922 = vcmp.eq.s32.totalorder %v1574, 1
    %vm1923 = vcmp.eq.s32.totalorder %v1575, 1
    %vm1924 = vcmp.eq.s32.totalorder %v1576, 1
    %vm1925 = vcmp.eq.s32.totalorder %v1577, 1
    %vm1926 = vcmp.eq.s32.totalorder %v1578, 1
    %vm1927 = vcmp.eq.s32.totalorder %v1579, 1
    %vm1928 = vcmp.eq.s32.totalorder %v1580, 1
    %vm1929 = vcmp.eq.s32.totalorder %v1581, 1
    %vm1930 = vcmp.eq.s32.totalorder %v1582, 1
    %vm1931 = vcmp.eq.s32.totalorder %v1583, 1
    %vm1932 = vcmp.eq.s32.totalorder %v1584, 1
    %vm1933 = vcmp.eq.s32.totalorder %v1585, 1
    %vm1934 = vcmp.eq.s32.totalorder %v1586, 1
    %vm1935 = vcmp.eq.s32.totalorder %v1587, 1
    %vm1936 = vcmp.eq.s32.totalorder %v1588, 1
    %vm1937 = vcmp.eq.s32.totalorder %v1589, 1
    %vm1938 = vcmp.eq.s32.totalorder %v1590, 1
    %vm1939 = vcmp.eq.s32.totalorder %v1591, 1
    %vm1940 = vcmp.eq.s32.totalorder %v1592, 1
    %vm1941 = vcmp.eq.s32.totalorder %v1593, 1
    %vm1942 = vcmp.eq.s32.totalorder %v1594, 1
    %vm1943 = vcmp.eq.s32.totalorder %v1595, 1
    %vm1944 = vcmp.eq.s32.totalorder %v1596, 1
    %vm1945 = vcmp.eq.s32.totalorder %v1597, 1
    %vm1946 = vcmp.eq.s32.totalorder %v1598, 1
    %vm1947 = vcmp.eq.s32.totalorder %v1599, 1
    %vm1948 = vcmp.eq.s32.totalorder %v1600, 1
    %vm1949 = vcmp.eq.s32.totalorder %v1601, 1
    %vm1950 = vcmp.eq.s32.totalorder %v1602, 1
    %vm1951 = vcmp.eq.s32.totalorder %v1603, 1
    %vm1952 = vcmp.eq.s32.totalorder %v1604, 1
    %vm1953 = vcmp.eq.s32.totalorder %v1605, 1
    %vm1954 = vcmp.eq.s32.totalorder %v1606, 1
    %vm1955 = vcmp.eq.s32.totalorder %v1607, 1
    %vm1956 = vcmp.eq.s32.totalorder %v1608, 1
    %vm1957 = vcmp.eq.s32.totalorder %v1609, 1
    %vm1958 = vcmp.eq.s32.totalorder %v1610, 1
    %vm1959 = vcmp.eq.s32.totalorder %v1611, 1
    %vm1960 = vcmp.eq.s32.totalorder %v1612, 1
    %vm1961 = vcmp.eq.s32.totalorder %v1613, 1
    %vm1962 = vcmp.eq.s32.totalorder %v1614, 1
    %vm1963 = vcmp.eq.s32.totalorder %v1615, 1
    %vm1964 = vcmp.eq.s32.totalorder %v1616, 1
    %vm1965 = vcmp.eq.s32.totalorder %v1617, 1
    %vm1966 = vcmp.eq.s32.totalorder %v1618, 1
    %vm1967 = vcmp.eq.s32.totalorder %v1619, 1
    %vm1968 = vcmp.eq.s32.totalorder %v1620, 1
    %vm1969 = vcmp.eq.s32.totalorder %v1621, 1
    %vm1970 = vcmp.eq.s32.totalorder %v1622, 1
    %vm1971 = vcmp.eq.s32.totalorder %v1623, 1
    %vm1972 = vcmp.eq.s32.totalorder %v1624, 1
    %vm1973 = vcmp.eq.s32.totalorder %v1625, 1
    %vm1974 = vcmp.eq.s32.totalorder %v1626, 1
    %vm1975 = vcmp.eq.s32.totalorder %v1627, 1
    %vm1976 = vcmp.eq.s32.totalorder %v1628, 1
    %vm1977 = vcmp.eq.s32.totalorder %v1629, 1
    %vm1978 = vcmp.eq.s32.totalorder %v1630, 1
    %vm1979 = vcmp.eq.s32.totalorder %v1631, 1
    %vm1980 = vcmp.eq.s32.totalorder %v1632, 1
    %vm1981 = vcmp.eq.s32.totalorder %v1633, 1
    %vm1982 = vcmp.eq.s32.totalorder %v1634, 1
    %vm1983 = vcmp.eq.s32.totalorder %v1635, 1
    %vm1984 = vcmp.eq.s32.totalorder %v1636, 1
    %vm1985 = vcmp.eq.s32.totalorder %v1637, 1
    %vm1986 = vcmp.eq.s32.totalorder %v1638, 1
    %vm1987 = vcmp.eq.s32.totalorder %v1639, 1
    %vm1988 = vcmp.eq.s32.totalorder %v1640, 1
    %vm1989 = vcmp.eq.s32.totalorder %v1641, 1
    %vm1990 = vcmp.eq.s32.totalorder %v1642, 1
    %vm1991 = vcmp.eq.s32.totalorder %v1643, 1
    %vm1992 = vcmp.eq.s32.totalorder %v1644, 1
    %vm1993 = vcmp.eq.s32.totalorder %v1645, 1
    %vm1994 = vcmp.eq.s32.totalorder %v1646, 1
    %vm1995 = vcmp.eq.s32.totalorder %v1647, 1
    %vm1996 = vcmp.eq.s32.totalorder %v1648, 1
    %vm1997 = vcmp.eq.s32.totalorder %v1649, 1
    %vm1998 = vcmp.eq.s32.totalorder %v1650, 1
    %vm1999 = vcmp.eq.s32.totalorder %v1651, 1
    %vm2000 = vcmp.eq.s32.totalorder %v1652, 1
    %vm2001 = vcmp.eq.s32.totalorder %v1653, 1
    %vm2002 = vcmp.eq.s32.totalorder %v1654, 1
    %vm2003 = vcmp.eq.s32.totalorder %v1655, 1
    %vm2004 = vcmp.eq.s32.totalorder %v1656, 1
    %vm2005 = vcmp.eq.s32.totalorder %v1657, 1
    %vm2006 = vcmp.eq.s32.totalorder %v1658, 1
    %vm2007 = vcmp.eq.s32.totalorder %v1659, 1
    %vm2008 = vcmp.eq.s32.totalorder %v1660, 1
    %vm2009 = vcmp.eq.s32.totalorder %v1661, 1
    %vm2010 = vcmp.eq.s32.totalorder %v1662, 1
    %vm2011 = vcmp.eq.s32.totalorder %v1663, 1
    %vm2012 = vcmp.eq.s32.totalorder %v1664, 1
    %vm2013 = vcmp.eq.s32.totalorder %v1665, 1
    %vm2014 = vcmp.eq.s32.totalorder %v1666, 1
    %vm2015 = vcmp.eq.s32.totalorder %v1667, 1
    %vm2016 = vcmp.eq.s32.totalorder %v1668, 1
    %vm2017 = vcmp.eq.s32.totalorder %v1669, 1
    %vm2018 = vcmp.eq.s32.totalorder %v1670, 1
    %vm2019 = vcmp.eq.s32.totalorder %v1671, 1
    %vm2020 = vcmp.eq.s32.totalorder %v1672, 1
    %vm2021 = vcmp.eq.s32.totalorder %v1673, 1
    %vm2022 = vcmp.eq.s32.totalorder %v1674, 1
    %vm2023 = vcmp.eq.s32.totalorder %v1675, 1
    %vm2024 = vcmp.eq.s32.totalorder %v1676, 1
    %vm2025 = vcmp.eq.s32.totalorder %v1677, 1
    %vm2026 = vcmp.eq.s32.totalorder %v1678, 1
    %vm2027 = vcmp.eq.s32.totalorder %v1679, 1
    %vm2028 = vcmp.eq.s32.totalorder %v1680, 1
    %vm2029 = vcmp.eq.s32.totalorder %v1681, 1
    %vm2030 = vcmp.eq.s32.totalorder %v1682, 1
    %vm2031 = vcmp.eq.s32.totalorder %v1683, 1
    %vm2032 = vcmp.eq.s32.totalorder %v1684, 1
    %vm2033 = vcmp.eq.s32.totalorder %v1685, 1
    %vm2034 = vcmp.eq.s32.totalorder %v1686, 1
    %vm2035 = vcmp.eq.s32.totalorder %v1687, 1
    %vm2036 = vcmp.eq.s32.totalorder %v1688, 1
    %vm2037 = vcmp.eq.s32.totalorder %v1689, 1
    %vm2038 = vcmp.eq.s32.totalorder %v1690, 1
    %vm2039 = vcmp.eq.s32.totalorder %v1691, 1
    %vm2040 = vcmp.eq.s32.totalorder %v1692, 1
    %vm2041 = vcmp.eq.s32.totalorder %v1693, 1
    %vm2042 = vcmp.eq.s32.totalorder %v1694, 1
    %vm2043 = vcmp.eq.s32.totalorder %v1695, 1
    %vm2044 = vcmp.eq.s32.totalorder %v1696, 1
    %vm2045 = vcmp.eq.s32.totalorder %v1697, 1
    %vm2046 = vcmp.eq.s32.totalorder %v1698, 1
    %vm2047 = vcmp.eq.s32.totalorder %v1699, 1
    %vm2048 = vcmp.eq.s32.totalorder %v1700, 1
    %vm2049 = vcmp.eq.s32.totalorder %v1701, 1
    %vm2050 = vcmp.eq.s32.totalorder %v1702, 1
    %vm2051 = vcmp.eq.s32.totalorder %v1703, 1
    %vm2052 = vcmp.eq.s32.totalorder %v1704, 1
    %vm2053 = vcmp.eq.s32.totalorder %v1705, 1
    %vm2054 = vcmp.eq.s32.totalorder %v1706, 1
    %vm2055 = vcmp.eq.s32.totalorder %v1707, 1
    %vm2056 = vcmp.eq.s32.totalorder %v1708, 1
    %vm2057 = vcmp.eq.s32.totalorder %v1709, 1
    %vm2058 = vcmp.eq.s32.totalorder %v1710, 1
    %vm2059 = vcmp.eq.s32.totalorder %v1711, 1
    %vm2060 = vcmp.eq.s32.totalorder %v1712, 1
    %vm2061 = vcmp.eq.s32.totalorder %v1713, 1
    %vm2062 = vcmp.eq.s32.totalorder %v1714, 1
    %vm2063 = vcmp.eq.s32.totalorder %v1715, 1
    %vm2064 = vcmp.eq.s32.totalorder %v1716, 1
    %vm2065 = vcmp.eq.s32.totalorder %v1717, 1
    %vm2066 = vcmp.eq.s32.totalorder %v1718, 1
    %vm2067 = vcmp.eq.s32.totalorder %v1719, 1
    %vm2068 = vcmp.eq.s32.totalorder %v1720, 1
    %vm2069 = vcmp.eq.s32.totalorder %v1721, 1
    %vm2070 = vcmp.eq.s32.totalorder %v1722, 1
    %vm2071 = vcmp.eq.s32.totalorder %v1723, 1
    %vm2072 = vcmp.eq.s32.totalorder %v1724, 1
    %vm2073 = vcmp.eq.s32.totalorder %v1725, 1
    %vm2074 = vcmp.eq.s32.totalorder %v1726, 1
    %vm2075 = vcmp.eq.s32.totalorder %v1727, 1
    %vm2076 = vcmp.eq.s32.totalorder %v1728, 1
    %vm2077 = vcmp.eq.s32.totalorder %v1729, 1
    %vm2078 = vcmp.eq.s32.totalorder %v1730, 1
    %vm2079 = vcmp.eq.s32.totalorder %v1731, 1
    %vm2080 = vcmp.eq.s32.totalorder %v1732, 1
    %vm2081 = vcmp.eq.s32.totalorder %v1733, 1
    %vm2082 = vcmp.eq.s32.totalorder %v1734, 1
    %vm2083 = vcmp.eq.s32.totalorder %v1735, 1
    %vm2084 = vcmp.eq.s32.totalorder %v1736, 1
    %vm2085 = vcmp.eq.s32.totalorder %v1737, 1
    %vm2086 = vcmp.eq.s32.totalorder %v1738, 1
    %vm2087 = vcmp.eq.s32.totalorder %v1739, 1
    %vm2088 = vcmp.eq.s32.totalorder %v1740, 1
    %vm2089 = vcmp.eq.s32.totalorder %v1741, 1
    %vm2090 = vcmp.eq.s32.totalorder %v1742, 1
    %vm2091 = vcmp.eq.s32.totalorder %v1743, 1
    %vm2092 = vcmp.eq.s32.totalorder %v1744, 1
    %vm2093 = vcmp.eq.s32.totalorder %v1745, 1
    %vm2094 = vcmp.eq.s32.totalorder %v1746, 1
    %vm2095 = vcmp.eq.s32.totalorder %v1747, 1
    %vm2096 = vcmp.eq.s32.totalorder %v1748, 1
    %vm2097 = vcmp.eq.s32.totalorder %v1749, 1
    %vm2098 = vcmp.eq.s32.totalorder %v1750, 1
    %vm2099 = vcmp.eq.s32.totalorder %v1751, 1
    %vm2100 = vcmp.eq.s32.totalorder %v1752, 1
    %vm2101 = vcmp.eq.s32.totalorder %v1753, 1
    %vm2102 = vcmp.eq.s32.totalorder %v1754, 1
    %vm2103 = vcmp.eq.s32.totalorder %v1755, 1
    %vm2104 = vcmp.eq.s32.totalorder %v1756, 1
    %vm2105 = vcmp.eq.s32.totalorder %v1757, 1
    %vm2106 = vcmp.eq.s32.totalorder %v1758, 1
    %vm2107 = vcmp.eq.s32.totalorder %v1759, 1
    %vm2108 = vcmp.eq.s32.totalorder %v1760, 1
    %vm2109 = vcmp.eq.s32.totalorder %v1761, 1
    %vm2110 = vcmp.eq.s32.totalorder %v1762, 1
    %vm2111 = vcmp.eq.s32.totalorder %v1763, 1
    %vm2112 = vcmp.eq.s32.totalorder %v1764, 1
    %vm2113 = vcmp.eq.s32.totalorder %v1765, 1
    %vm2114 = vcmp.eq.s32.totalorder %v1766, 1
    %vm2115 = vcmp.eq.s32.totalorder %v1767, 1
    %vm2116 = vcmp.eq.s32.totalorder %v1768, 1
    %vm2117 = vcmp.eq.s32.totalorder %v1769, 1
    %vm2118 = vcmp.eq.s32.totalorder %v1770, 1
    %vm2119 = vcmp.eq.s32.totalorder %v1771, 1
    %vm2120 = vcmp.eq.s32.totalorder %v1772, 1
    %vm2121 = vcmp.eq.s32.totalorder %v1773, 1
    %vm2122 = vcmp.eq.s32.totalorder %v1774, 1
    %vm2123 = vcmp.eq.s32.totalorder %v1775, 1
    %vm2124 = vcmp.eq.s32.totalorder %v1776, 1
    %vm2125 = vcmp.eq.s32.totalorder %v1777, 1
    %vm2126 = vcmp.eq.s32.totalorder %v1778, 1
    %vm2127 = vcmp.eq.s32.totalorder %v1779, 1
    %vm2128 = vcmp.eq.s32.totalorder %v1780, 1
    %vm2129 = vcmp.eq.s32.totalorder %v1781, 1
    %v2130 = vsel %vm1782, %v1086, 0.0
    %v2131 = vsel %vm1783, %v1087, 0.0
    %v2132 = vsel %vm1784, %v1088, 0.0
    %v2133 = vsel %vm1785, %v1089, 0.0
    %v2134 = vsel %vm1786, %v1090, 0.0
    %v2135 = vsel %vm1787, %v1091, 0.0
    %v2136 = vsel %vm1788, %v1092, 0.0
    %v2137 = vsel %vm1789, %v1093, 0.0
    %v2138 = vsel %vm1790, %v1094, 0.0
    %v2139 = vsel %vm1791, %v1095, 0.0
    %v2140 = vsel %vm1792, %v1096, 0.0
    %v2141 = vsel %vm1793, %v1097, 0.0
    %v2142 = vsel %vm1794, %v1098, 0.0
    %v2143 = vsel %vm1795, %v1099, 0.0
    %v2144 = vsel %vm1796, %v1100, 0.0
    %v2145 = vsel %vm1797, %v1101, 0.0
    %v2146 = vsel %vm1798, %v1102, 0.0
    %v2147 = vsel %vm1799, %v1103, 0.0
    %v2148 = vsel %vm1800, %v1104, 0.0
    %v2149 = vsel %vm1801, %v1105, 0.0
    %v2150 = vsel %vm1802, %v1106, 0.0
    %v2151 = vsel %vm1803, %v1107, 0.0
    %v2152 = vsel %vm1804, %v1108, 0.0
    %v2153 = vsel %vm1805, %v1109, 0.0
    %v2154 = vsel %vm1806, %v1110, 0.0
    %v2155 = vsel %vm1807, %v1111, 0.0
    %v2156 = vsel %vm1808, %v1112, 0.0
    %v2157 = vsel %vm1809, %v1113, 0.0
    %v2158 = vsel %vm1810, %v1114, 0.0
    %v2159 = vsel %vm1811, %v1115, 0.0
    %v2160 = vsel %vm1812, %v1116, 0.0
    %v2161 = vsel %vm1813, %v1117, 0.0
    %v2162 = vsel %vm1814, %v1118, 0.0
    %v2163 = vsel %vm1815, %v1119, 0.0
    %v2164 = vsel %vm1816, %v1120, 0.0
    %v2165 = vsel %vm1817, %v1121, 0.0
    %v2166 = vsel %vm1818, %v1122, 0.0
    %v2167 = vsel %vm1819, %v1123, 0.0
    %v2168 = vsel %vm1820, %v1124, 0.0
    %v2169 = vsel %vm1821, %v1125, 0.0
    %v2170 = vsel %vm1822, %v1126, 0.0
    %v2171 = vsel %vm1823, %v1127, 0.0
    %v2172 = vsel %vm1824, %v1128, 0.0
    %v2173 = vsel %vm1825, %v1129, 0.0
    %v2174 = vsel %vm1826, %v1130, 0.0
    %v2175 = vsel %vm1827, %v1131, 0.0
    %v2176 = vsel %vm1828, %v1132, 0.0
    %v2177 = vsel %vm1829, %v1133, 0.0
    %v2178 = vsel %vm1830, %v1134, 0.0
    %v2179 = vsel %vm1831, %v1135, 0.0
    %v2180 = vsel %vm1832, %v1136, 0.0
    %v2181 = vsel %vm1833, %v1137, 0.0
    %v2182 = vsel %vm1834, %v1138, 0.0
    %v2183 = vsel %vm1835, %v1139, 0.0
    %v2184 = vsel %vm1836, %v1140, 0.0
    %v2185 = vsel %vm1837, %v1141, 0.0
    %v2186 = vsel %vm1838, %v1142, 0.0
    %v2187 = vsel %vm1839, %v1143, 0.0
    %v2188 = vsel %vm1840, %v1144, 0.0
    %v2189 = vsel %vm1841, %v1145, 0.0
    %v2190 = vsel %vm1842, %v1146, 0.0
    %v2191 = vsel %vm1843, %v1147, 0.0
    %v2192 = vsel %vm1844, %v1148, 0.0
    %v2193 = vsel %vm1845, %v1149, 0.0
    %v2194 = vsel %vm1846, %v1150, 0.0
    %v2195 = vsel %vm1847, %v1151, 0.0
    %v2196 = vsel %vm1848, %v1152, 0.0
    %v2197 = vsel %vm1849, %v1153, 0.0
    %v2198 = vsel %vm1850, %v1154, 0.0
    %v2199 = vsel %vm1851, %v1155, 0.0
    %v2200 = vsel %vm1852, %v1156, 0.0
    %v2201 = vsel %vm1853, %v1157, 0.0
    %v2202 = vsel %vm1854, %v1158, 0.0
    %v2203 = vsel %vm1855, %v1159, 0.0
    %v2204 = vsel %vm1856, %v1160, 0.0
    %v2205 = vsel %vm1857, %v1161, 0.0
    %v2206 = vsel %vm1858, %v1162, 0.0
    %v2207 = vsel %vm1859, %v1163, 0.0
    %v2208 = vsel %vm1860, %v1164, 0.0
    %v2209 = vsel %vm1861, %v1165, 0.0
    %v2210 = vsel %vm1862, %v1166, 0.0
    %v2211 = vsel %vm1863, %v1167, 0.0
    %v2212 = vsel %vm1864, %v1168, 0.0
    %v2213 = vsel %vm1865, %v1169, 0.0
    %v2214 = vsel %vm1866, %v1170, 0.0
    %v2215 = vsel %vm1867, %v1171, 0.0
    %v2216 = vsel %vm1868, %v1172, 0.0
    %v2217 = vsel %vm1869, %v1173, 0.0
    %v2218 = vsel %vm1870, %v1174, 0.0
    %v2219 = vsel %vm1871, %v1175, 0.0
    %v2220 = vsel %vm1872, %v1176, 0.0
    %v2221 = vsel %vm1873, %v1177, 0.0
    %v2222 = vsel %vm1874, %v1178, 0.0
    %v2223 = vsel %vm1875, %v1179, 0.0
    %v2224 = vsel %vm1876, %v1180, 0.0
    %v2225 = vsel %vm1877, %v1181, 0.0
    %v2226 = vsel %vm1878, %v1182, 0.0
    %v2227 = vsel %vm1879, %v1183, 0.0
    %v2228 = vsel %vm1880, %v1184, 0.0
    %v2229 = vsel %vm1881, %v1185, 0.0
    %v2230 = vsel %vm1882, %v1186, 0.0
    %v2231 = vsel %vm1883, %v1187, 0.0
    %v2232 = vsel %vm1884, %v1188, 0.0
    %v2233 = vsel %vm1885, %v1189, 0.0
    %v2234 = vsel %vm1886, %v1190, 0.0
    %v2235 = vsel %vm1887, %v1191, 0.0
    %v2236 = vsel %vm1888, %v1192, 0.0
    %v2237 = vsel %vm1889, %v1193, 0.0
    %v2238 = vsel %vm1890, %v1194, 0.0
    %v2239 = vsel %vm1891, %v1195, 0.0
    %v2240 = vsel %vm1892, %v1196, 0.0
    %v2241 = vsel %vm1893, %v1197, 0.0
    %v2242 = vsel %vm1894, %v1198, 0.0
    %v2243 = vsel %vm1895, %v1199, 0.0
    %v2244 = vsel %vm1896, %v1200, 0.0
    %v2245 = vsel %vm1897, %v1201, 0.0
    %v2246 = vsel %vm1898, %v1202, 0.0
    %v2247 = vsel %vm1899, %v1203, 0.0
    %v2248 = vsel %vm1900, %v1204, 0.0
    %v2249 = vsel %vm1901, %v1205, 0.0
    %v2250 = vsel %vm1902, %v1206, 0.0
    %v2251 = vsel %vm1903, %v1207, 0.0
    %v2252 = vsel %vm1904, %v1208, 0.0
    %v2253 = vsel %vm1905, %v1209, 0.0
    %v2254 = vsel %vm1906, %v1210, 0.0
    %v2255 = vsel %vm1907, %v1211, 0.0
    %v2256 = vsel %vm1908, %v1212, 0.0
    %v2257 = vsel %vm1909, %v1213, 0.0
    %v2258 = vsel %vm1910, %v1214, 0.0
    %v2259 = vsel %vm1911, %v1215, 0.0
    %v2260 = vsel %vm1912, %v1216, 0.0
    %v2261 = vsel %vm1913, %v1217, 0.0
    %v2262 = vsel %vm1914, %v1218, 0.0
    %v2263 = vsel %vm1915, %v1219, 0.0
    %v2264 = vsel %vm1916, %v1220, 0.0
    %v2265 = vsel %vm1917, %v1221, 0.0
    %v2266 = vsel %vm1918, %v1222, 0.0
    %v2267 = vsel %vm1919, %v1223, 0.0
    %v2268 = vsel %vm1920, %v1224, 0.0
    %v2269 = vsel %vm1921, %v1225, 0.0
    %v2270 = vsel %vm1922, %v1226, 0.0
    %v2271 = vsel %vm1923, %v1227, 0.0
    %v2272 = vsel %vm1924, %v1228, 0.0
    %v2273 = vsel %vm1925, %v1229, 0.0
    %v2274 = vsel %vm1926, %v1230, 0.0
    %v2275 = vsel %vm1927, %v1231, 0.0
    %v2276 = vsel %vm1928, %v1232, 0.0
    %v2277 = vsel %vm1929, %v1233, 0.0
    %v2278 = vsel %vm1930, %v1234, 0.0
    %v2279 = vsel %vm1931, %v1235, 0.0
    %v2280 = vsel %vm1932, %v1236, 0.0
    %v2281 = vsel %vm1933, %v1237, 0.0
    %v2282 = vsel %vm1934, %v1238, 0.0
    %v2283 = vsel %vm1935, %v1239, 0.0
    %v2284 = vsel %vm1936, %v1240, 0.0
    %v2285 = vsel %vm1937, %v1241, 0.0
    %v2286 = vsel %vm1938, %v1242, 0.0
    %v2287 = vsel %vm1939, %v1243, 0.0
    %v2288 = vsel %vm1940, %v1244, 0.0
    %v2289 = vsel %vm1941, %v1245, 0.0
    %v2290 = vsel %vm1942, %v1246, 0.0
    %v2291 = vsel %vm1943, %v1247, 0.0
    %v2292 = vsel %vm1944, %v1248, 0.0
    %v2293 = vsel %vm1945, %v1249, 0.0
    %v2294 = vsel %vm1946, %v1250, 0.0
    %v2295 = vsel %vm1947, %v1251, 0.0
    %v2296 = vsel %vm1948, %v1252, 0.0
    %v2297 = vsel %vm1949, %v1253, 0.0
    %v2298 = vsel %vm1950, %v1254, 0.0
    %v2299 = vsel %vm1951, %v1255, 0.0
    %v2300 = vsel %vm1952, %v1256, 0.0
    %v2301 = vsel %vm1953, %v1257, 0.0
    %v2302 = vsel %vm1954, %v1258, 0.0
    %v2303 = vsel %vm1955, %v1259, 0.0
    %v2304 = vsel %vm1956, %v1260, 0.0
    %v2305 = vsel %vm1957, %v1261, 0.0
    %v2306 = vsel %vm1958, %v1262, 0.0
    %v2307 = vsel %vm1959, %v1263, 0.0
    %v2308 = vsel %vm1960, %v1264, 0.0
    %v2309 = vsel %vm1961, %v1265, 0.0
    %v2310 = vsel %vm1962, %v1266, 0.0
    %v2311 = vsel %vm1963, %v1267, 0.0
    %v2312 = vsel %vm1964, %v1268, 0.0
    %v2313 = vsel %vm1965, %v1269, 0.0
    %v2314 = vsel %vm1966, %v1270, 0.0
    %v2315 = vsel %vm1967, %v1271, 0.0
    %v2316 = vsel %vm1968, %v1272, 0.0
    %v2317 = vsel %vm1969, %v1273, 0.0
    %v2318 = vsel %vm1970, %v1274, 0.0
    %v2319 = vsel %vm1971, %v1275, 0.0
    %v2320 = vsel %vm1972, %v1276, 0.0
    %v2321 = vsel %vm1973, %v1277, 0.0
    %v2322 = vsel %vm1974, %v1278, 0.0
    %v2323 = vsel %vm1975, %v1279, 0.0
    %v2324 = vsel %vm1976, %v1280, 0.0
    %v2325 = vsel %vm1977, %v1281, 0.0
    %v2326 = vsel %vm1978, %v1282, 0.0
    %v2327 = vsel %vm1979, %v1283, 0.0
    %v2328 = vsel %vm1980, %v1284, 0.0
    %v2329 = vsel %vm1981, %v1285, 0.0
    %v2330 = vsel %vm1982, %v1286, 0.0
    %v2331 = vsel %vm1983, %v1287, 0.0
    %v2332 = vsel %vm1984, %v1288, 0.0
    %v2333 = vsel %vm1985, %v1289, 0.0
    %v2334 = vsel %vm1986, %v1290, 0.0
    %v2335 = vsel %vm1987, %v1291, 0.0
    %v2336 = vsel %vm1988, %v1292, 0.0
    %v2337 = vsel %vm1989, %v1293, 0.0
    %v2338 = vsel %vm1990, %v1294, 0.0
    %v2339 = vsel %vm1991, %v1295, 0.0
    %v2340 = vsel %vm1992, %v1296, 0.0
    %v2341 = vsel %vm1993, %v1297, 0.0
    %v2342 = vsel %vm1994, %v1298, 0.0
    %v2343 = vsel %vm1995, %v1299, 0.0
    %v2344 = vsel %vm1996, %v1300, 0.0
    %v2345 = vsel %vm1997, %v1301, 0.0
    %v2346 = vsel %vm1998, %v1302, 0.0
    %v2347 = vsel %vm1999, %v1303, 0.0
    %v2348 = vsel %vm2000, %v1304, 0.0
    %v2349 = vsel %vm2001, %v1305, 0.0
    %v2350 = vsel %vm2002, %v1306, 0.0
    %v2351 = vsel %vm2003, %v1307, 0.0
    %v2352 = vsel %vm2004, %v1308, 0.0
    %v2353 = vsel %vm2005, %v1309, 0.0
    %v2354 = vsel %vm2006, %v1310, 0.0
    %v2355 = vsel %vm2007, %v1311, 0.0
    %v2356 = vsel %vm2008, %v1312, 0.0
    %v2357 = vsel %vm2009, %v1313, 0.0
    %v2358 = vsel %vm2010, %v1314, 0.0
    %v2359 = vsel %vm2011, %v1315, 0.0
    %v2360 = vsel %vm2012, %v1316, 0.0
    %v2361 = vsel %vm2013, %v1317, 0.0
    %v2362 = vsel %vm2014, %v1318, 0.0
    %v2363 = vsel %vm2015, %v1319, 0.0
    %v2364 = vsel %vm2016, %v1320, 0.0
    %v2365 = vsel %vm2017, %v1321, 0.0
    %v2366 = vsel %vm2018, %v1322, 0.0
    %v2367 = vsel %vm2019, %v1323, 0.0
    %v2368 = vsel %vm2020, %v1324, 0.0
    %v2369 = vsel %vm2021, %v1325, 0.0
    %v2370 = vsel %vm2022, %v1326, 0.0
    %v2371 = vsel %vm2023, %v1327, 0.0
    %v2372 = vsel %vm2024, %v1328, 0.0
    %v2373 = vsel %vm2025, %v1329, 0.0
    %v2374 = vsel %vm2026, %v1330, 0.0
    %v2375 = vsel %vm2027, %v1331, 0.0
    %v2376 = vsel %vm2028, %v1332, 0.0
    %v2377 = vsel %vm2029, %v1333, 0.0
    %v2378 = vsel %vm2030, %v1334, 0.0
    %v2379 = vsel %vm2031, %v1335, 0.0
    %v2380 = vsel %vm2032, %v1336, 0.0
    %v2381 = vsel %vm2033, %v1337, 0.0
    %v2382 = vsel %vm2034, %v1338, 0.0
    %v2383 = vsel %vm2035, %v1339, 0.0
    %v2384 = vsel %vm2036, %v1340, 0.0
    %v2385 = vsel %vm2037, %v1341, 0.0
    %v2386 = vsel %vm2038, %v1342, 0.0
    %v2387 = vsel %vm2039, %v1343, 0.0
    %v2388 = vsel %vm2040, %v1344, 0.0
    %v2389 = vsel %vm2041, %v1345, 0.0
    %v2390 = vsel %vm2042, %v1346, 0.0
    %v2391 = vsel %vm2043, %v1347, 0.0
    %v2392 = vsel %vm2044, %v1348, 0.0
    %v2393 = vsel %vm2045, %v1349, 0.0
    %v2394 = vsel %vm2046, %v1350, 0.0
    %v2395 = vsel %vm2047, %v1351, 0.0
    %v2396 = vsel %vm2048, %v1352, 0.0
    %v2397 = vsel %vm2049, %v1353, 0.0
    %v2398 = vsel %vm2050, %v1354, 0.0
    %v2399 = vsel %vm2051, %v1355, 0.0
    %v2400 = vsel %vm2052, %v1356, 0.0
    %v2401 = vsel %vm2053, %v1357, 0.0
    %v2402 = vsel %vm2054, %v1358, 0.0
    %v2403 = vsel %vm2055, %v1359, 0.0
    %v2404 = vsel %vm2056, %v1360, 0.0
    %v2405 = vsel %vm2057, %v1361, 0.0
    %v2406 = vsel %vm2058, %v1362, 0.0
    %v2407 = vsel %vm2059, %v1363, 0.0
    %v2408 = vsel %vm2060, %v1364, 0.0
    %v2409 = vsel %vm2061, %v1365, 0.0
    %v2410 = vsel %vm2062, %v1366, 0.0
    %v2411 = vsel %vm2063, %v1367, 0.0
    %v2412 = vsel %vm2064, %v1368, 0.0
    %v2413 = vsel %vm2065, %v1369, 0.0
    %v2414 = vsel %vm2066, %v1370, 0.0
    %v2415 = vsel %vm2067, %v1371, 0.0
    %v2416 = vsel %vm2068, %v1372, 0.0
    %v2417 = vsel %vm2069, %v1373, 0.0
    %v2418 = vsel %vm2070, %v1374, 0.0
    %v2419 = vsel %vm2071, %v1375, 0.0
    %v2420 = vsel %vm2072, %v1376, 0.0
    %v2421 = vsel %vm2073, %v1377, 0.0
    %v2422 = vsel %vm2074, %v1378, 0.0
    %v2423 = vsel %vm2075, %v1379, 0.0
    %v2424 = vsel %vm2076, %v1380, 0.0
    %v2425 = vsel %vm2077, %v1381, 0.0
    %v2426 = vsel %vm2078, %v1382, 0.0
    %v2427 = vsel %vm2079, %v1383, 0.0
    %v2428 = vsel %vm2080, %v1384, 0.0
    %v2429 = vsel %vm2081, %v1385, 0.0
    %v2430 = vsel %vm2082, %v1386, 0.0
    %v2431 = vsel %vm2083, %v1387, 0.0
    %v2432 = vsel %vm2084, %v1388, 0.0
    %v2433 = vsel %vm2085, %v1389, 0.0
    %v2434 = vsel %vm2086, %v1390, 0.0
    %v2435 = vsel %vm2087, %v1391, 0.0
    %v2436 = vsel %vm2088, %v1392, 0.0
    %v2437 = vsel %vm2089, %v1393, 0.0
    %v2438 = vsel %vm2090, %v1394, 0.0
    %v2439 = vsel %vm2091, %v1395, 0.0
    %v2440 = vsel %vm2092, %v1396, 0.0
    %v2441 = vsel %vm2093, %v1397, 0.0
    %v2442 = vsel %vm2094, %v1398, 0.0
    %v2443 = vsel %vm2095, %v1399, 0.0
    %v2444 = vsel %vm2096, %v1400, 0.0
    %v2445 = vsel %vm2097, %v1401, 0.0
    %v2446 = vsel %vm2098, %v1402, 0.0
    %v2447 = vsel %vm2099, %v1403, 0.0
    %v2448 = vsel %vm2100, %v1404, 0.0
    %v2449 = vsel %vm2101, %v1405, 0.0
    %v2450 = vsel %vm2102, %v1406, 0.0
    %v2451 = vsel %vm2103, %v1407, 0.0
    %v2452 = vsel %vm2104, %v1408, 0.0
    %v2453 = vsel %vm2105, %v1409, 0.0
    %v2454 = vsel %vm2106, %v1410, 0.0
    %v2455 = vsel %vm2107, %v1411, 0.0
    %v2456 = vsel %vm2108, %v1412, 0.0
    %v2457 = vsel %vm2109, %v1413, 0.0
    %v2458 = vsel %vm2110, %v1414, 0.0
    %v2459 = vsel %vm2111, %v1415, 0.0
    %v2460 = vsel %vm2112, %v1416, 0.0
    %v2461 = vsel %vm2113, %v1417, 0.0
    %v2462 = vsel %vm2114, %v1418, 0.0
    %v2463 = vsel %vm2115, %v1419, 0.0
    %v2464 = vsel %vm2116, %v1420, 0.0
    %v2465 = vsel %vm2117, %v1421, 0.0
    %v2466 = vsel %vm2118, %v1422, 0.0
    %v2467 = vsel %vm2119, %v1423, 0.0
    %v2468 = vsel %vm2120, %v1424, 0.0
    %v2469 = vsel %vm2121, %v1425, 0.0
    %v2470 = vsel %vm2122, %v1426, 0.0
    %v2471 = vsel %vm2123, %v1427, 0.0
    %v2472 = vsel %vm2124, %v1428, 0.0
    %v2473 = vsel %vm2125, %v1429, 0.0
    %v2474 = vsel %vm2126, %v1430, 0.0
    %v2475 = vsel %vm2127, %v1431, 0.0
    %v2476 = vsel %vm2128, %v1432, 0.0
    %v2477 = vsel %vm2129, %v1433, 0.0
    %v2481 = vperm.slane %v37, 0
    %v2482 = vperm.slane %v37, 1
    %v2483 = vperm.slane %v37, 2
    %v2484 = vperm.slane %v37, 3
    %v2485 = vperm.slane %v37, 4
    %v2486 = vperm.slane %v37, 5
    %v2487 = vperm.slane %v37, 6
    %v2488 = vperm.slane %v37, 7
    %v2489 = vperm.slane %v38, 0
    %v2490 = vperm.slane %v38, 1
    %v2491 = vperm.slane %v38, 2
    %v2492 = vperm.slane %v38, 3
    %v2493 = vperm.slane %v38, 4
    %v2494 = vperm.slane %v38, 5
    %v2495 = vperm.slane %v38, 6
    %v2496 = vperm.slane %v38, 7
    %v2497 = vperm.slane %v39, 0
    %v2498 = vperm.slane %v39, 1
    %v2499 = vperm.slane %v39, 2
    %v2500 = vperm.slane %v39, 3
    %v2501 = vperm.slane %v39, 4
    %v2502 = vperm.slane %v39, 5
    %vm2524 = vcmask 728064
    %v2525 = vsel %vm2524, %v2502, 0
    %vm2527 = vcmask 1040384
    %v2529 = vsel %vm2527, %v2477, 0
    %2531 = vmatpush.msra.mxu0 %v2145
    %2532 = vmatpush.msra.mxu0 %v2144
    %2533 = vmatpush.msra.mxu0 %v2143
    %2534 = vmatpush.msra.mxu0 %v2142
    %2535 = vmatpush.msra.mxu0 %v2141
    %2536 = vmatpush.msra.mxu0 %v2140
    %2537 = vmatpush.msra.mxu0 %v2139
    %2538 = vmatpush.msra.mxu0 %v2138
    %2539 = vmatpush.msra.mxu0 %v2137
    %2540 = vmatpush.msra.mxu0 %v2136
    %2541 = vmatpush.msra.mxu0 %v2135
    %2542 = vmatpush.msra.mxu0 %v2134
    %2543 = vmatpush.msra.mxu0 %v2133
    %2544 = vmatpush.msra.mxu0 %v2132
    %2545 = vmatpush.msra.mxu0 %v2131
    %2546 = vmatpush.msra.mxu0 %v2130
    %2547 = vmatmul.f32.gmra.mxu0 %v2481
    %v2548 = vpop.f32.mrf.mxu0
    %v2549 = vadd.f32 0.0, %v2548
    %2550 = vdwg.mxu0
    %2551 = vmatpush.msra.mxu0 %v2161
    %2552 = vmatpush.msra.mxu0 %v2160
    %2553 = vmatpush.msra.mxu0 %v2159
    %2554 = vmatpush.msra.mxu0 %v2158
    %2555 = vmatpush.msra.mxu0 %v2157
    %2556 = vmatpush.msra.mxu0 %v2156
    %2557 = vmatpush.msra.mxu0 %v2155
    %2558 = vmatpush.msra.mxu0 %v2154
    %2559 = vmatpush.msra.mxu0 %v2153
    %2560 = vmatpush.msra.mxu0 %v2152
    %2561 = vmatpush.msra.mxu0 %v2151
    %2562 = vmatpush.msra.mxu0 %v2150
    %2563 = vmatpush.msra.mxu0 %v2149
    %2564 = vmatpush.msra.mxu0 %v2148
    %2565 = vmatpush.msra.mxu0 %v2147
    %2566 = vmatpush.msra.mxu0 %v2146
    %2567 = vmatmul.f32.gmra.mxu0 %v2482
    %v2568 = vpop.f32.mrf.mxu0
    %v2569 = vadd.f32 %v2549, %v2568
    %2570 = vdwg.mxu0
    %2571 = vmatpush.msra.mxu0 %v2177
    %2572 = vmatpush.msra.mxu0 %v2176
    %2573 = vmatpush.msra.mxu0 %v2175
    %2574 = vmatpush.msra.mxu0 %v2174
    %2575 = vmatpush.msra.mxu0 %v2173
    %2576 = vmatpush.msra.mxu0 %v2172
    %2577 = vmatpush.msra.mxu0 %v2171
    %2578 = vmatpush.msra.mxu0 %v2170
    %2579 = vmatpush.msra.mxu0 %v2169
    %2580 = vmatpush.msra.mxu0 %v2168
    %2581 = vmatpush.msra.mxu0 %v2167
    %2582 = vmatpush.msra.mxu0 %v2166
    %2583 = vmatpush.msra.mxu0 %v2165
    %2584 = vmatpush.msra.mxu0 %v2164
    %2585 = vmatpush.msra.mxu0 %v2163
    %2586 = vmatpush.msra.mxu0 %v2162
    %2587 = vmatmul.f32.gmra.mxu0 %v2483
    %v2588 = vpop.f32.mrf.mxu0
    %v2589 = vadd.f32 %v2569, %v2588
    %2590 = vdwg.mxu0
    %2591 = vmatpush.msra.mxu0 %v2193
    %2592 = vmatpush.msra.mxu0 %v2192
    %2593 = vmatpush.msra.mxu0 %v2191
    %2594 = vmatpush.msra.mxu0 %v2190
    %2595 = vmatpush.msra.mxu0 %v2189
    %2596 = vmatpush.msra.mxu0 %v2188
    %2597 = vmatpush.msra.mxu0 %v2187
    %2598 = vmatpush.msra.mxu0 %v2186
    %2599 = vmatpush.msra.mxu0 %v2185
    %2600 = vmatpush.msra.mxu0 %v2184
    %2601 = vmatpush.msra.mxu0 %v2183
    %2602 = vmatpush.msra.mxu0 %v2182
    %2603 = vmatpush.msra.mxu0 %v2181
    %2604 = vmatpush.msra.mxu0 %v2180
    %2605 = vmatpush.msra.mxu0 %v2179
    %2606 = vmatpush.msra.mxu0 %v2178
    %2607 = vmatmul.f32.gmra.mxu0 %v2484
    %v2608 = vpop.f32.mrf.mxu0
    %v2609 = vadd.f32 %v2589, %v2608
    %2610 = vdwg.mxu0
    %2611 = vmatpush.msra.mxu0 %v2209
    %2612 = vmatpush.msra.mxu0 %v2208
    %2613 = vmatpush.msra.mxu0 %v2207
    %2614 = vmatpush.msra.mxu0 %v2206
    %2615 = vmatpush.msra.mxu0 %v2205
    %2616 = vmatpush.msra.mxu0 %v2204
    %2617 = vmatpush.msra.mxu0 %v2203
    %2618 = vmatpush.msra.mxu0 %v2202
    %2619 = vmatpush.msra.mxu0 %v2201
    %2620 = vmatpush.msra.mxu0 %v2200
    %2621 = vmatpush.msra.mxu0 %v2199
    %2622 = vmatpush.msra.mxu0 %v2198
    %2623 = vmatpush.msra.mxu0 %v2197
    %2624 = vmatpush.msra.mxu0 %v2196
    %2625 = vmatpush.msra.mxu0 %v2195
    %2626 = vmatpush.msra.mxu0 %v2194
    %2627 = vmatmul.f32.gmra.mxu0 %v2485
    %v2628 = vpop.f32.mrf.mxu0
    %v2629 = vadd.f32 %v2609, %v2628
    %2630 = vdwg.mxu0
    %2631 = vmatpush.msra.mxu0 %v2225
    %2632 = vmatpush.msra.mxu0 %v2224
    %2633 = vmatpush.msra.mxu0 %v2223
    %2634 = vmatpush.msra.mxu0 %v2222
    %2635 = vmatpush.msra.mxu0 %v2221
    %2636 = vmatpush.msra.mxu0 %v2220
    %2637 = vmatpush.msra.mxu0 %v2219
    %2638 = vmatpush.msra.mxu0 %v2218
    %2639 = vmatpush.msra.mxu0 %v2217
    %2640 = vmatpush.msra.mxu0 %v2216
    %2641 = vmatpush.msra.mxu0 %v2215
    %2642 = vmatpush.msra.mxu0 %v2214
    %2643 = vmatpush.msra.mxu0 %v2213
    %2644 = vmatpush.msra.mxu0 %v2212
    %2645 = vmatpush.msra.mxu0 %v2211
    %2646 = vmatpush.msra.mxu0 %v2210
    %2647 = vmatmul.f32.gmra.mxu0 %v2486
    %v2648 = vpop.f32.mrf.mxu0
    %v2649 = vadd.f32 %v2629, %v2648
    %2650 = vdwg.mxu0
    %2651 = vmatpush.msra.mxu0 %v2241
    %2652 = vmatpush.msra.mxu0 %v2240
    %2653 = vmatpush.msra.mxu0 %v2239
    %2654 = vmatpush.msra.mxu0 %v2238
    %2655 = vmatpush.msra.mxu0 %v2237
    %2656 = vmatpush.msra.mxu0 %v2236
    %2657 = vmatpush.msra.mxu0 %v2235
    %2658 = vmatpush.msra.mxu0 %v2234
    %2659 = vmatpush.msra.mxu0 %v2233
    %2660 = vmatpush.msra.mxu0 %v2232
    %2661 = vmatpush.msra.mxu0 %v2231
    %2662 = vmatpush.msra.mxu0 %v2230
    %2663 = vmatpush.msra.mxu0 %v2229
    %2664 = vmatpush.msra.mxu0 %v2228
    %2665 = vmatpush.msra.mxu0 %v2227
    %2666 = vmatpush.msra.mxu0 %v2226
    %2667 = vmatmul.f32.gmra.mxu0 %v2487
    %v2668 = vpop.f32.mrf.mxu0
    %v2669 = vadd.f32 %v2649, %v2668
    %2670 = vdwg.mxu0
    %2671 = vmatpush.msra.mxu0 %v2257
    %2672 = vmatpush.msra.mxu0 %v2256
    %2673 = vmatpush.msra.mxu0 %v2255
    %2674 = vmatpush.msra.mxu0 %v2254
    %2675 = vmatpush.msra.mxu0 %v2253
    %2676 = vmatpush.msra.mxu0 %v2252
    %2677 = vmatpush.msra.mxu0 %v2251
    %2678 = vmatpush.msra.mxu0 %v2250
    %2679 = vmatpush.msra.mxu0 %v2249
    %2680 = vmatpush.msra.mxu0 %v2248
    %2681 = vmatpush.msra.mxu0 %v2247
    %2682 = vmatpush.msra.mxu0 %v2246
    %2683 = vmatpush.msra.mxu0 %v2245
    %2684 = vmatpush.msra.mxu0 %v2244
    %2685 = vmatpush.msra.mxu0 %v2243
    %2686 = vmatpush.msra.mxu0 %v2242
    %2687 = vmatmul.f32.gmra.mxu0 %v2488
    %v2688 = vpop.f32.mrf.mxu0
    %v2689 = vadd.f32 %v2669, %v2688
    %2690 = vdwg.mxu0
    %2691 = vmatpush.msra.mxu0 %v2273
    %2692 = vmatpush.msra.mxu0 %v2272
    %2693 = vmatpush.msra.mxu0 %v2271
    %2694 = vmatpush.msra.mxu0 %v2270
    %2695 = vmatpush.msra.mxu0 %v2269
    %2696 = vmatpush.msra.mxu0 %v2268
    %2697 = vmatpush.msra.mxu0 %v2267
    %2698 = vmatpush.msra.mxu0 %v2266
    %2699 = vmatpush.msra.mxu0 %v2265
    %2700 = vmatpush.msra.mxu0 %v2264
    %2701 = vmatpush.msra.mxu0 %v2263
    %2702 = vmatpush.msra.mxu0 %v2262
    %2703 = vmatpush.msra.mxu0 %v2261
    %2704 = vmatpush.msra.mxu0 %v2260
    %2705 = vmatpush.msra.mxu0 %v2259
    %2706 = vmatpush.msra.mxu0 %v2258
    %2707 = vmatmul.f32.gmra.mxu0 %v2489
    %v2708 = vpop.f32.mrf.mxu0
    %v2709 = vadd.f32 %v2689, %v2708
    %2710 = vdwg.mxu0
    %2711 = vmatpush.msra.mxu0 %v2289
    %2712 = vmatpush.msra.mxu0 %v2288
    %2713 = vmatpush.msra.mxu0 %v2287
    %2714 = vmatpush.msra.mxu0 %v2286
    %2715 = vmatpush.msra.mxu0 %v2285
    %2716 = vmatpush.msra.mxu0 %v2284
    %2717 = vmatpush.msra.mxu0 %v2283
    %2718 = vmatpush.msra.mxu0 %v2282
    %2719 = vmatpush.msra.mxu0 %v2281
    %2720 = vmatpush.msra.mxu0 %v2280
    %2721 = vmatpush.msra.mxu0 %v2279
    %2722 = vmatpush.msra.mxu0 %v2278
    %2723 = vmatpush.msra.mxu0 %v2277
    %2724 = vmatpush.msra.mxu0 %v2276
    %2725 = vmatpush.msra.mxu0 %v2275
    %2726 = vmatpush.msra.mxu0 %v2274
    %2727 = vmatmul.f32.gmra.mxu0 %v2490
    %v2728 = vpop.f32.mrf.mxu0
    %v2729 = vadd.f32 %v2709, %v2728
    %2730 = vdwg.mxu0
    %2731 = vmatpush.msra.mxu0 %v2305
    %2732 = vmatpush.msra.mxu0 %v2304
    %2733 = vmatpush.msra.mxu0 %v2303
    %2734 = vmatpush.msra.mxu0 %v2302
    %2735 = vmatpush.msra.mxu0 %v2301
    %2736 = vmatpush.msra.mxu0 %v2300
    %2737 = vmatpush.msra.mxu0 %v2299
    %2738 = vmatpush.msra.mxu0 %v2298
    %2739 = vmatpush.msra.mxu0 %v2297
    %2740 = vmatpush.msra.mxu0 %v2296
    %2741 = vmatpush.msra.mxu0 %v2295
    %2742 = vmatpush.msra.mxu0 %v2294
    %2743 = vmatpush.msra.mxu0 %v2293
    %2744 = vmatpush.msra.mxu0 %v2292
    %2745 = vmatpush.msra.mxu0 %v2291
    %2746 = vmatpush.msra.mxu0 %v2290
    %2747 = vmatmul.f32.gmra.mxu0 %v2491
    %v2748 = vpop.f32.mrf.mxu0
    %v2749 = vadd.f32 %v2729, %v2748
    %2750 = vdwg.mxu0
    %2751 = vmatpush.msra.mxu0 %v2321
    %2752 = vmatpush.msra.mxu0 %v2320
    %2753 = vmatpush.msra.mxu0 %v2319
    %2754 = vmatpush.msra.mxu0 %v2318
    %2755 = vmatpush.msra.mxu0 %v2317
    %2756 = vmatpush.msra.mxu0 %v2316
    %2757 = vmatpush.msra.mxu0 %v2315
    %2758 = vmatpush.msra.mxu0 %v2314
    %2759 = vmatpush.msra.mxu0 %v2313
    %2760 = vmatpush.msra.mxu0 %v2312
    %2761 = vmatpush.msra.mxu0 %v2311
    %2762 = vmatpush.msra.mxu0 %v2310
    %2763 = vmatpush.msra.mxu0 %v2309
    %2764 = vmatpush.msra.mxu0 %v2308
    %2765 = vmatpush.msra.mxu0 %v2307
    %2766 = vmatpush.msra.mxu0 %v2306
    %2767 = vmatmul.f32.gmra.mxu0 %v2492
    %v2768 = vpop.f32.mrf.mxu0
    %v2769 = vadd.f32 %v2749, %v2768
    %2770 = vdwg.mxu0
    %2771 = vmatpush.msra.mxu0 %v2337
    %2772 = vmatpush.msra.mxu0 %v2336
    %2773 = vmatpush.msra.mxu0 %v2335
    %2774 = vmatpush.msra.mxu0 %v2334
    %2775 = vmatpush.msra.mxu0 %v2333
    %2776 = vmatpush.msra.mxu0 %v2332
    %2777 = vmatpush.msra.mxu0 %v2331
    %2778 = vmatpush.msra.mxu0 %v2330
    %2779 = vmatpush.msra.mxu0 %v2329
    %2780 = vmatpush.msra.mxu0 %v2328
    %2781 = vmatpush.msra.mxu0 %v2327
    %2782 = vmatpush.msra.mxu0 %v2326
    %2783 = vmatpush.msra.mxu0 %v2325
    %2784 = vmatpush.msra.mxu0 %v2324
    %2785 = vmatpush.msra.mxu0 %v2323
    %2786 = vmatpush.msra.mxu0 %v2322
    %2787 = vmatmul.f32.gmra.mxu0 %v2493
    %v2788 = vpop.f32.mrf.mxu0
    %v2789 = vadd.f32 %v2769, %v2788
    %2790 = vdwg.mxu0
    %2791 = vmatpush.msra.mxu0 %v2353
    %2792 = vmatpush.msra.mxu0 %v2352
    %2793 = vmatpush.msra.mxu0 %v2351
    %2794 = vmatpush.msra.mxu0 %v2350
    %2795 = vmatpush.msra.mxu0 %v2349
    %2796 = vmatpush.msra.mxu0 %v2348
    %2797 = vmatpush.msra.mxu0 %v2347
    %2798 = vmatpush.msra.mxu0 %v2346
    %2799 = vmatpush.msra.mxu0 %v2345
    %2800 = vmatpush.msra.mxu0 %v2344
    %2801 = vmatpush.msra.mxu0 %v2343
    %2802 = vmatpush.msra.mxu0 %v2342
    %2803 = vmatpush.msra.mxu0 %v2341
    %2804 = vmatpush.msra.mxu0 %v2340
    %2805 = vmatpush.msra.mxu0 %v2339
    %2806 = vmatpush.msra.mxu0 %v2338
    %2807 = vmatmul.f32.gmra.mxu0 %v2494
    %v2808 = vpop.f32.mrf.mxu0
    %v2809 = vadd.f32 %v2789, %v2808
    %2810 = vdwg.mxu0
    %2811 = vmatpush.msra.mxu0 %v2369
    %2812 = vmatpush.msra.mxu0 %v2368
    %2813 = vmatpush.msra.mxu0 %v2367
    %2814 = vmatpush.msra.mxu0 %v2366
    %2815 = vmatpush.msra.mxu0 %v2365
    %2816 = vmatpush.msra.mxu0 %v2364
    %2817 = vmatpush.msra.mxu0 %v2363
    %2818 = vmatpush.msra.mxu0 %v2362
    %2819 = vmatpush.msra.mxu0 %v2361
    %2820 = vmatpush.msra.mxu0 %v2360
    %2821 = vmatpush.msra.mxu0 %v2359
    %2822 = vmatpush.msra.mxu0 %v2358
    %2823 = vmatpush.msra.mxu0 %v2357
    %2824 = vmatpush.msra.mxu0 %v2356
    %2825 = vmatpush.msra.mxu0 %v2355
    %2826 = vmatpush.msra.mxu0 %v2354
    %2827 = vmatmul.f32.gmra.mxu0 %v2495
    %v2828 = vpop.f32.mrf.mxu0
    %v2829 = vadd.f32 %v2809, %v2828
    %2830 = vdwg.mxu0
    %2831 = vmatpush.msra.mxu0 %v2385
    %2832 = vmatpush.msra.mxu0 %v2384
    %2833 = vmatpush.msra.mxu0 %v2383
    %2834 = vmatpush.msra.mxu0 %v2382
    %2835 = vmatpush.msra.mxu0 %v2381
    %2836 = vmatpush.msra.mxu0 %v2380
    %2837 = vmatpush.msra.mxu0 %v2379
    %2838 = vmatpush.msra.mxu0 %v2378
    %2839 = vmatpush.msra.mxu0 %v2377
    %2840 = vmatpush.msra.mxu0 %v2376
    %2841 = vmatpush.msra.mxu0 %v2375
    %2842 = vmatpush.msra.mxu0 %v2374
    %2843 = vmatpush.msra.mxu0 %v2373
    %2844 = vmatpush.msra.mxu0 %v2372
    %2845 = vmatpush.msra.mxu0 %v2371
    %2846 = vmatpush.msra.mxu0 %v2370
    %2847 = vmatmul.f32.gmra.mxu0 %v2496
    %v2848 = vpop.f32.mrf.mxu0
    %v2849 = vadd.f32 %v2829, %v2848
    %2850 = vdwg.mxu0
    %2851 = vmatpush.msra.mxu0 %v2401
    %2852 = vmatpush.msra.mxu0 %v2400
    %2853 = vmatpush.msra.mxu0 %v2399
    %2854 = vmatpush.msra.mxu0 %v2398
    %2855 = vmatpush.msra.mxu0 %v2397
    %2856 = vmatpush.msra.mxu0 %v2396
    %2857 = vmatpush.msra.mxu0 %v2395
    %2858 = vmatpush.msra.mxu0 %v2394
    %2859 = vmatpush.msra.mxu0 %v2393
    %2860 = vmatpush.msra.mxu0 %v2392
    %2861 = vmatpush.msra.mxu0 %v2391
    %2862 = vmatpush.msra.mxu0 %v2390
    %2863 = vmatpush.msra.mxu0 %v2389
    %2864 = vmatpush.msra.mxu0 %v2388
    %2865 = vmatpush.msra.mxu0 %v2387
    %2866 = vmatpush.msra.mxu0 %v2386
    %2867 = vmatmul.f32.gmra.mxu0 %v2497
    %v2868 = vpop.f32.mrf.mxu0
    %v2869 = vadd.f32 %v2849, %v2868
    %2870 = vdwg.mxu0
    %2871 = vmatpush.msra.mxu0 %v2417
    %2872 = vmatpush.msra.mxu0 %v2416
    %2873 = vmatpush.msra.mxu0 %v2415
    %2874 = vmatpush.msra.mxu0 %v2414
    %2875 = vmatpush.msra.mxu0 %v2413
    %2876 = vmatpush.msra.mxu0 %v2412
    %2877 = vmatpush.msra.mxu0 %v2411
    %2878 = vmatpush.msra.mxu0 %v2410
    %2879 = vmatpush.msra.mxu0 %v2409
    %2880 = vmatpush.msra.mxu0 %v2408
    %2881 = vmatpush.msra.mxu0 %v2407
    %2882 = vmatpush.msra.mxu0 %v2406
    %2883 = vmatpush.msra.mxu0 %v2405
    %2884 = vmatpush.msra.mxu0 %v2404
    %2885 = vmatpush.msra.mxu0 %v2403
    %2886 = vmatpush.msra.mxu0 %v2402
    %2887 = vmatmul.f32.gmra.mxu0 %v2498
    %v2888 = vpop.f32.mrf.mxu0
    %v2889 = vadd.f32 %v2869, %v2888
    %2890 = vdwg.mxu0
    %2891 = vmatpush.msra.mxu0 %v2433
    %2892 = vmatpush.msra.mxu0 %v2432
    %2893 = vmatpush.msra.mxu0 %v2431
    %2894 = vmatpush.msra.mxu0 %v2430
    %2895 = vmatpush.msra.mxu0 %v2429
    %2896 = vmatpush.msra.mxu0 %v2428
    %2897 = vmatpush.msra.mxu0 %v2427
    %2898 = vmatpush.msra.mxu0 %v2426
    %2899 = vmatpush.msra.mxu0 %v2425
    %2900 = vmatpush.msra.mxu0 %v2424
    %2901 = vmatpush.msra.mxu0 %v2423
    %2902 = vmatpush.msra.mxu0 %v2422
    %2903 = vmatpush.msra.mxu0 %v2421
    %2904 = vmatpush.msra.mxu0 %v2420
    %2905 = vmatpush.msra.mxu0 %v2419
    %2906 = vmatpush.msra.mxu0 %v2418
    %2907 = vmatmul.f32.gmra.mxu0 %v2499
    %v2908 = vpop.f32.mrf.mxu0
    %v2909 = vadd.f32 %v2889, %v2908
    %2910 = vdwg.mxu0
    %2911 = vmatpush.msra.mxu0 %v2449
    %2912 = vmatpush.msra.mxu0 %v2448
    %2913 = vmatpush.msra.mxu0 %v2447
    %2914 = vmatpush.msra.mxu0 %v2446
    %2915 = vmatpush.msra.mxu0 %v2445
    %2916 = vmatpush.msra.mxu0 %v2444
    %2917 = vmatpush.msra.mxu0 %v2443
    %2918 = vmatpush.msra.mxu0 %v2442
    %2919 = vmatpush.msra.mxu0 %v2441
    %2920 = vmatpush.msra.mxu0 %v2440
    %2921 = vmatpush.msra.mxu0 %v2439
    %2922 = vmatpush.msra.mxu0 %v2438
    %2923 = vmatpush.msra.mxu0 %v2437
    %2924 = vmatpush.msra.mxu0 %v2436
    %2925 = vmatpush.msra.mxu0 %v2435
    %2926 = vmatpush.msra.mxu0 %v2434
    %2927 = vmatmul.f32.gmra.mxu0 %v2500
    %v2928 = vpop.f32.mrf.mxu0
    %v2929 = vadd.f32 %v2909, %v2928
    %2930 = vdwg.mxu0
    %2931 = vmatpush.msra.mxu0 %v2465
    %2932 = vmatpush.msra.mxu0 %v2464
    %2933 = vmatpush.msra.mxu0 %v2463
    %2934 = vmatpush.msra.mxu0 %v2462
    %2935 = vmatpush.msra.mxu0 %v2461
    %2936 = vmatpush.msra.mxu0 %v2460
    %2937 = vmatpush.msra.mxu0 %v2459
    %2938 = vmatpush.msra.mxu0 %v2458
    %2939 = vmatpush.msra.mxu0 %v2457
    %2940 = vmatpush.msra.mxu0 %v2456
    %2941 = vmatpush.msra.mxu0 %v2455
    %2942 = vmatpush.msra.mxu0 %v2454
    %2943 = vmatpush.msra.mxu0 %v2453
    %2944 = vmatpush.msra.mxu0 %v2452
    %2945 = vmatpush.msra.mxu0 %v2451
    %2946 = vmatpush.msra.mxu0 %v2450
    %2947 = vmatmul.f32.gmra.mxu0 %v2501
    %v2948 = vpop.f32.mrf.mxu0
    %v2949 = vadd.f32 %v2929, %v2948
    %2950 = vdwg.mxu0
    %2951 = vmatpush.msra.mxu0 0.0
    %2952 = vmatpush.msra.mxu0 0.0
    %2953 = vmatpush.msra.mxu0 0.0
    %2954 = vmatpush.msra.mxu0 0.0
    %2955 = vmatpush.msra.mxu0 %v2529
    %2956 = vmatpush.msra.mxu0 %v2476
    %2957 = vmatpush.msra.mxu0 %v2475
    %2958 = vmatpush.msra.mxu0 %v2474
    %2959 = vmatpush.msra.mxu0 %v2473
    %2960 = vmatpush.msra.mxu0 %v2472
    %2961 = vmatpush.msra.mxu0 %v2471
    %2962 = vmatpush.msra.mxu0 %v2470
    %2963 = vmatpush.msra.mxu0 %v2469
    %2964 = vmatpush.msra.mxu0 %v2468
    %2965 = vmatpush.msra.mxu0 %v2467
    %2966 = vmatpush.msra.mxu0 %v2466
    %2967 = vmatmul.f32.gmra.mxu0 %v2525
    %v2968 = vpop.f32.mrf.mxu0
    %v2969 = vadd.f32 %v2949, %v2968
    %2970 = vdwg.mxu0
    %2971 = vst [vmem:[%s2] sm:$0x1] %v2969
    // Predicated region
    $region14: #{weight_linear_forward.1} parent=1 // pred_check
      _
    $region15: #{weight_linear_forward.1} parent=1 // pred_check_branch
      %2973 = sbr.rel (0) target = $region17
    $region16: #{weight_linear_forward.1} parent=1 // pred_region
      _
    $region17: #{weight_linear_forward.1} parent=1 // pred_fallthru
      _
    // Predicated region
    $region18: #{weight_linear_forward.1} parent=1 // pred_check
      _
    $region19: #{weight_linear_forward.1} parent=1 // pred_check_branch
      %2975 = sbr.rel (0) target = $region21
    $region20: #{weight_linear_forward.1} parent=1 // pred_region
      _
    $region21: #{weight_linear_forward.1} parent=1 // pred_fallthru
      _
    %2976 = vsyncpa [#allocation3], 1

</llo_original>
